<compile_context>
chip_gen: v5e
topology: v5e:2x2
jax: 0.10.0
libtpu: 0.0.40
codegen_flags: <defaults>
</compile_context>

<pallas_src>
import functools

import jax
import jax.numpy as jnp
from jax import lax
from jax.experimental import pallas as pl
from jax.experimental.pallas import tpu as pltpu

LANE = 128          # lane-dense padded width for Cout / num_classes
BN_EPS = 1e-5


def _round_up(x, m):
    return (x + m - 1) // m * m


# ----------------------------- Pallas kernels -------------------------------

def conv_bn_relu_kernel(x_ref, w_ref, b_ref, o_ref, *, Ws):
    """One sample: stride-2 3x3 conv (4 shifted matmuls over the space-to-depth
    input) with BN/bias pre-folded into w/b, then ReLU.

    x_ref : [R, K]     bf16  flattened s2d rows (R >= Hs*Ws + 1, zero padded)
    w_ref : [4, K, Cp] bf16  folded weights, one [K, Cp] matrix per 2x2 tap
    b_ref : [1, Cp]    f32   folded bias row
    o_ref : [M, Cp]    bf16  M = Ho * Ws flattened output rows (lane-dense)
    """
    M, Cp = o_ref.shape
    acc = jnp.zeros((M, Cp), jnp.float32)
    for t in range(4):                          # the 2x2 taps of the s2d conv
        a, b = divmod(t, 2)
        s = a * Ws + b                          # static shifted window start
        acc = acc + jnp.dot(x_ref[s:s + M, :], w_ref[t],
                            preferred_element_type=jnp.float32)
    o_ref[...] = jnp.maximum(acc + b_ref[...], 0.0).astype(o_ref.dtype)


def body_head_kernel(x_ref, w_ref, b_ref, poolw_ref, wl_ref, bl_ref, o_ref, *, Ws):
    """One sample: backbone-body conv (+ folded BN + ReLU) with the global
    average pool and the classifier Linear fused into the epilogue, so the
    feature map never leaves VMEM.

    poolw_ref : [M, 1]    f32  1/(Ho*Wo) on valid columns, 0 on the halo column
    wl_ref    : [Cp, NCp] f32  classifier weight (transposed, zero padded)
    bl_ref    : [1, NCp]  f32  classifier bias row
    o_ref     : [1, NCp]  f32  logits row for this sample
    """
    M = poolw_ref.shape[0]
    Cp = w_ref.shape[2]
    acc = jnp.zeros((M, Cp), jnp.float32)
    for t in range(4):
        a, b = divmod(t, 2)
        s = a * Ws + b
        acc = acc + jnp.dot(x_ref[s:s + M, :], w_ref[t],
                            preferred_element_type=jnp.float32)
    y = jnp.maximum(acc + b_ref[...], 0.0)                        # ReLU feats (f32)
    pooled = jnp.sum(y * poolw_ref[...], axis=0, keepdims=True)   # fused GAP [1, Cp]
    o_ref[...] = jnp.dot(pooled, wl_ref[...],
                         preferred_element_type=jnp.float32) + bl_ref[...]


# ------------------------------- JAX glue ------------------------------------

def _space_to_depth(x_nhwc, pad):
    """Pad spatially and fold 2x2 spatial blocks into channels (input read 1x).
    [N, H, W, C] -> [N, (H+2p)//2, (W+2p)//2, 4*C], channel order (di, dj, c)."""
    x = jnp.pad(x_nhwc, ((0, 0), (pad, pad), (pad, pad), (0, 0)))
    N, Hp, Wp, C = x.shape
    assert Hp % 2 == 0 and Wp % 2 == 0
    x = x.reshape(N, Hp // 2, 2, Wp // 2, 2, C)
    x = jnp.transpose(x, (0, 1, 3, 2, 4, 5))
    return x.reshape(N, Hp // 2, Wp // 2, 4 * C)


def _fold_conv_bn_s2d(p, cin_pad, cout_pad, eps=BN_EPS):
    """Fold BN(eval) + conv bias into the weights, and re-express the stride-2
    3x3 conv as a stride-1 2x2 conv over the space-to-depth input.
    Returns w2 [4, 4*cin_pad, cout_pad] (bf16) and the bias row [1, cout_pad]."""
    w, bias = p['w'], p['b']
    Cout, Cin, kh, kw = w.shape
    assert (kh, kw) == (3, 3)
    inv = p['gamma'] * lax.rsqrt(p['var'] + eps)
    wf = w * inv[:, None, None, None]                 # BN scale -> conv weight
    bfold = (bias - p['mean']) * inv + p['beta']      # folded bias
    w2 = jnp.zeros((2, 2, 2, 2, cin_pad, cout_pad), jnp.float32)
    for a in range(2):
        for b in range(2):
            for di in range(2):
                for dj in range(2):
                    i, j = 2 * a + di, 2 * b + dj
                    if i < kh and j < kw:
                        w2 = w2.at[a, b, di, dj, :Cin, :Cout].set(wf[:, :, i, j].T)
    w2 = w2.reshape(4, 4 * cin_pad, cout_pad).astype(jnp.bfloat16)
    brow = jnp.zeros((1, cout_pad), jnp.float32).at[0, :Cout].set(bfold)
    return w2, brow


def _prepare_conv(x_nhwc, p, cout_pad):
    """Shared wrapper glue for one stride-2 3x3 conv layer (layout only)."""
    N, H, W, Cin = x_nhwc.shape
    assert H % 2 == 0 and W % 2 == 0
    cin_pad = _round_up(Cin, 8)
    if cin_pad != Cin:
        x_nhwc = jnp.pad(x_nhwc, ((0, 0), (0, 0), (0, 0), (0, cin_pad - Cin)))
    Ho, Wo = H // 2, W // 2
    xs = _space_to_depth(x_nhwc, pad=1)               # [N, Ho+1, Wo+1, 4*cin_pad]
    Hs, Ws, K = Ho + 1, Wo + 1, 4 * cin_pad
    R = _round_up(Hs * Ws + 1, 8)                     # +1 halo row for tap (1,1)
    xf = jnp.pad(xs.reshape(N, Hs * Ws, K), ((0, 0), (0, R - Hs * Ws), (0, 0)))
    xf = xf.astype(jnp.bfloat16)                      # bf16 only feeds the MXU
    w2, brow = _fold_conv_bn_s2d(p, cin_pad, cout_pad)
    return xf, w2, brow, (N, Ho, Wo, Ws, K, R)


def conv_bn_relu(x_nhwc, p, *, cout_pad=LANE):
    """clf_stem: Conv3x3/s2 + BN(eval) + ReLU as one fused Pallas kernel."""
    Cout = p['w'].shape[0]
    xf, w2, brow, (N, Ho, Wo, Ws, K, R) = _prepare_conv(x_nhwc, p, cout_pad)
    M = Ho * Ws
    out = pl.pallas_call(
        functools.partial(conv_bn_relu_kernel, Ws=Ws),
        grid=(N,),
        in_specs=[
            pl.BlockSpec((None, R, K), lambda n: (n, 0, 0)),
            pl.BlockSpec((4, K, cout_pad), lambda n: (0, 0, 0)),
            pl.BlockSpec((1, cout_pad), lambda n: (0, 0)),
        ],
        out_specs=pl.BlockSpec((None, M, cout_pad), lambda n: (n, 0, 0)),
        out_shape=jax.ShapeDtypeStruct((N, M, cout_pad), jnp.bfloat16),
        compiler_params=pltpu.CompilerParams(dimension_semantics=("parallel",)),
    )(xf, w2, brow)
    # drop the halo column (wo == Wo) and the lane padding beyond the real Cout
    return out.reshape(N, Ho, Ws, cout_pad)[:, :, :Wo, :Cout]


def body_and_clf_head(feats_nhwc, p, w_lin, b_lin, *, cout_pad=LANE, nc_pad=LANE):
    """backbone body conv + BN + ReLU + global-avg-pool + Linear, fully fused."""
    num_classes, c_in_lin = w_lin.shape
    xf, w2, brow, (N, Ho, Wo, Ws, K, R) = _prepare_conv(feats_nhwc, p, cout_pad)
    M = Ho * Ws
    # pooling weights: 1/(Ho*Wo) on valid columns, 0 on the halo column
    poolw = (jnp.arange(Ws) < Wo).astype(jnp.float32) / float(Ho * Wo)
    poolw = jnp.tile(poolw, Ho).reshape(M, 1)
    # classifier weight/bias, zero-padded to lane-dense widths
    wl = jnp.zeros((cout_pad, nc_pad), jnp.float32)
    wl = wl.at[:c_in_lin, :num_classes].set(w_lin.T.astype(jnp.float32))
    bl = jnp.zeros((1, nc_pad), jnp.float32).at[0, :num_classes].set(b_lin)

    out = pl.pallas_call(
        functools.partial(body_head_kernel, Ws=Ws),
        grid=(N,),
        in_specs=[
            pl.BlockSpec((None, R, K), lambda n: (n, 0, 0)),
            pl.BlockSpec((4, K, cout_pad), lambda n: (0, 0, 0)),
            pl.BlockSpec((1, cout_pad), lambda n: (0, 0)),
            pl.BlockSpec((M, 1), lambda n: (0, 0)),
            pl.BlockSpec((cout_pad, nc_pad), lambda n: (0, 0)),
            pl.BlockSpec((1, nc_pad), lambda n: (0, 0)),
        ],
        out_specs=pl.BlockSpec((None, 1, nc_pad), lambda n: (n, 0, 0)),
        out_shape=jax.ShapeDtypeStruct((N, 1, nc_pad), jnp.float32),
        compiler_params=pltpu.CompilerParams(dimension_semantics=("parallel",)),
    )(xf, w2, brow, poolw, wl, bl)
    return out.reshape(N, nc_pad)[:, :num_classes]


# --------------------------- parameter init ----------------------------------

def init_params(key, cin=3, c_stem=16, c_body=32, num_classes=10):
    ks = jax.random.split(key, 3)

    # Conv2d: kaiming_normal_(nonlinearity='relu') -> std = sqrt(2 / fan_in)
    def conv_params(k, cout, cin_, kh=3, kw=3):
        fan_in = cin_ * kh * kw
        w = jax.random.normal(k, (cout, cin_, kh, kw), jnp.float32) * \
            jnp.sqrt(2.0 / fan_in)
        b = jnp.zeros((cout,), jnp.float32)
        # BatchNorm2d: weight=1, bias=0, running_mean=0, running_var=1
        return dict(w=w, b=b, gamma=jnp.ones((cout,), jnp.float32),
                    beta=jnp.zeros((cout,), jnp.float32),
                    mean=jnp.zeros((cout,), jnp.float32),
                    var=jnp.ones((cout,), jnp.float32))

    stem = conv_params(ks[0], c_stem, cin)
    body = conv_params(ks[1], c_body, c_stem)
    # Linear: kaiming_uniform_(nonlinearity='relu') -> bound = sqrt(6 / fan_in)
    bound = jnp.sqrt(6.0 / c_body)
    w_lin = jax.random.uniform(ks[2], (num_classes, c_body), jnp.float32,
                               -bound, bound)
    b_lin = jnp.zeros((num_classes,), jnp.float32)
    return stem, body, (w_lin, b_lin)


# ------------------------------ forward ---------------------------------------

def general_net_forward_clf(images_nchw, stem, body, head):
    """GeneralNet._forward_val(task='clf'), eval mode -> logits (dict 'outputs')."""
    x = jnp.transpose(images_nchw, (0, 2, 3, 1))          # NCHW -> NHWC
    x = conv_bn_relu(x, stem)                             # clf_stem
    w_lin, b_lin = head
    return body_and_clf_head(x, body, w_lin, b_lin)       # backbone body + clf_head


# ------------------------------ reference -------------------------------------

def _ref_conv_bn_relu(x_nhwc, p, *, stride, pad):
    w = jnp.transpose(p['w'], (2, 3, 1, 0))               # HWIO
    y = lax.conv_general_dilated(x_nhwc, w, (stride, stride),
                                 [(pad, pad), (pad, pad)],
                                 dimension_numbers=('NHWC', 'HWIO', 'NHWC'))
    y = y + p['b']
    y = (y - p['mean']) * (p['gamma'] * lax.rsqrt(p['var'] + BN_EPS)) + p['beta']
    return jnp.maximum(y, 0.0)


def _ref_forward(images_nchw, stem, body, head):
    x = jnp.transpose(images_nchw, (0, 2, 3, 1))
    x = _ref_conv_bn_relu(x, stem, stride=2, pad=1)
    x = _ref_conv_bn_relu(x, body, stride=2, pad=1)
    pooled = jnp.mean(x, axis=(1, 2))
    w_lin, b_lin = head
    return pooled @ w_lin.T + b_lin


# -------------------------------- main -----------------------------------------

if __name__ == "__main__":
    key = jax.random.PRNGKey(0)
    k_img, k_par = jax.random.split(key)
    images = jax.random.normal(k_img, (2, 3, 32, 32), jnp.float32)   # NCHW
    stem, body, head = init_params(k_par)

    fwd = jax.jit(general_net_forward_clf)
    logits = jax.block_until_ready(fwd(images, stem, body, head))

    ref = _ref_forward(images, stem, body, head)
    assert logits.shape == (2, 10)
    max_err = float(jnp.max(jnp.abs(logits - ref)))
    # bf16 MXU operands -> looser tolerance than the f32-only version
    assert jnp.allclose(logits, ref, rtol=5e-2, atol=5e-2), \
        f"mismatch vs reference (max abs err = {max_err:.4f})"
    print("KERNEL_OK")
</pallas_src>

<mosaic_0001>
module attributes {stable_mosaic.version = 11 : i64} {
  func.func @conv_bn_relu_kernel(%arg0: i32, %arg1: memref<1x296x32xbf16, #tpu.memory_space<vmem>>, %arg2: memref<4x32x128xbf16, #tpu.memory_space<vmem>>, %arg3: memref<1x128xf32, #tpu.memory_space<vmem>>, %arg4: memref<1x272x128xbf16, #tpu.memory_space<vmem>>) attributes {dimension_semantics = [#tpu.dimension_semantics<parallel>], iteration_bounds = array<i64: 2>, scalar_prefetch = 0 : i64, scratch_operands = 0 : i64, tpu.core_type = #tpu.core_type<tc>, window_params = [{transform_indices = @transform_0, window_bounds = array<i64: 1, 296, 32>}, {pipeline_mode = #tpu.pipeline_mode<synchronous>, transform_indices = @transform_1, window_bounds = array<i64: 4, 32, 128>}, {pipeline_mode = #tpu.pipeline_mode<synchronous>, transform_indices = @transform_2, window_bounds = array<i64: 1, 128>}, {transform_indices = @transform_3, window_bounds = array<i64: 1, 272, 128>}]} {
    %cst = arith.constant 0.000000e+00 : f32
    %0 = vector.broadcast %cst : f32 to vector<272x128xf32>
    %c0 = arith.constant 0 : index
    %c0_0 = arith.constant 0 : index
    %c0_1 = arith.constant 0 : index
    %1 = vector.load %arg1[%c0, %c0_0, %c0_1] : memref<1x296x32xbf16, #tpu.memory_space<vmem>>, vector<1x272x32xbf16>
    %2 = vector.shape_cast %1 : vector<1x272x32xbf16> to vector<272x32xbf16>
    %c0_2 = arith.constant 0 : index
    %c0_3 = arith.constant 0 : index
    %c0_4 = arith.constant 0 : index
    %3 = vector.load %arg2[%c0_2, %c0_3, %c0_4] : memref<4x32x128xbf16, #tpu.memory_space<vmem>>, vector<1x32x128xbf16>
    %4 = vector.shape_cast %3 : vector<1x32x128xbf16> to vector<32x128xbf16>
    %cst_5 = arith.constant dense<0.000000e+00> : vector<272x128xf32>
    %5 = tpu.matmul %2, %4, %cst_5 {dimension_numbers = #tpu.dot_dimension_numbers<[1], [0], [0], [1], [0, 0, 1, 1], [], []>} : vector<272x32xbf16>, vector<32x128xbf16>, vector<272x128xf32> -> vector<272x128xf32>
    %6 = arith.addf %0, %5 : vector<272x128xf32>
    %c0_6 = arith.constant 0 : index
    %c1 = arith.constant 1 : index
    %c0_7 = arith.constant 0 : index
    %7 = vector.load %arg1[%c0_6, %c1, %c0_7] : memref<1x296x32xbf16, #tpu.memory_space<vmem>>, vector<1x272x32xbf16>
    %8 = vector.shape_cast %7 : vector<1x272x32xbf16> to vector<272x32xbf16>
    %c1_8 = arith.constant 1 : index
    %c0_9 = arith.constant 0 : index
    %c0_10 = arith.constant 0 : index
    %9 = vector.load %arg2[%c1_8, %c0_9, %c0_10] : memref<4x32x128xbf16, #tpu.memory_space<vmem>>, vector<1x32x128xbf16>
    %10 = vector.shape_cast %9 : vector<1x32x128xbf16> to vector<32x128xbf16>
    %cst_11 = arith.constant dense<0.000000e+00> : vector<272x128xf32>
    %11 = tpu.matmul %8, %10, %cst_11 {dimension_numbers = #tpu.dot_dimension_numbers<[1], [0], [0], [1], [0, 0, 1, 1], [], []>} : vector<272x32xbf16>, vector<32x128xbf16>, vector<272x128xf32> -> vector<272x128xf32>
    %12 = arith.addf %6, %11 : vector<272x128xf32>
    %c0_12 = arith.constant 0 : index
    %c17 = arith.constant 17 : index
    %c0_13 = arith.constant 0 : index
    %13 = vector.load %arg1[%c0_12, %c17, %c0_13] : memref<1x296x32xbf16, #tpu.memory_space<vmem>>, vector<1x272x32xbf16>
    %14 = vector.shape_cast %13 : vector<1x272x32xbf16> to vector<272x32xbf16>
    %c2 = arith.constant 2 : index
    %c0_14 = arith.constant 0 : index
    %c0_15 = arith.constant 0 : index
    %15 = vector.load %arg2[%c2, %c0_14, %c0_15] : memref<4x32x128xbf16, #tpu.memory_space<vmem>>, vector<1x32x128xbf16>
    %16 = vector.shape_cast %15 : vector<1x32x128xbf16> to vector<32x128xbf16>
    %cst_16 = arith.constant dense<0.000000e+00> : vector<272x128xf32>
    %17 = tpu.matmul %14, %16, %cst_16 {dimension_numbers = #tpu.dot_dimension_numbers<[1], [0], [0], [1], [0, 0, 1, 1], [], []>} : vector<272x32xbf16>, vector<32x128xbf16>, vector<272x128xf32> -> vector<272x128xf32>
    %18 = arith.addf %12, %17 : vector<272x128xf32>
    %c0_17 = arith.constant 0 : index
    %c18 = arith.constant 18 : index
    %c0_18 = arith.constant 0 : index
    %19 = vector.load %arg1[%c0_17, %c18, %c0_18] : memref<1x296x32xbf16, #tpu.memory_space<vmem>>, vector<1x272x32xbf16>
    %20 = vector.shape_cast %19 : vector<1x272x32xbf16> to vector<272x32xbf16>
    %c3 = arith.constant 3 : index
    %c0_19 = arith.constant 0 : index
    %c0_20 = arith.constant 0 : index
    %21 = vector.load %arg2[%c3, %c0_19, %c0_20] : memref<4x32x128xbf16, #tpu.memory_space<vmem>>, vector<1x32x128xbf16>
    %22 = vector.shape_cast %21 : vector<1x32x128xbf16> to vector<32x128xbf16>
    %cst_21 = arith.constant dense<0.000000e+00> : vector<272x128xf32>
    %23 = tpu.matmul %20, %22, %cst_21 {dimension_numbers = #tpu.dot_dimension_numbers<[1], [0], [0], [1], [0, 0, 1, 1], [], []>} : vector<272x32xbf16>, vector<32x128xbf16>, vector<272x128xf32> -> vector<272x128xf32>
    %24 = arith.addf %18, %23 : vector<272x128xf32>
    %c0_22 = arith.constant 0 : index
    %c0_23 = arith.constant 0 : index
    %25 = vector.load %arg3[%c0_22, %c0_23] : memref<1x128xf32, #tpu.memory_space<vmem>>, vector<1x128xf32>
    %26 = vector.broadcast %25 : vector<1x128xf32> to vector<272x128xf32>
    %27 = arith.addf %24, %26 : vector<272x128xf32>
    %cst_24 = arith.constant 0.000000e+00 : f32
    %28 = vector.broadcast %cst_24 : f32 to vector<272x128xf32>
    %29 = arith.maximumf %27, %28 : vector<272x128xf32>
    %30 = arith.truncf %29 : vector<272x128xf32> to vector<272x128xbf16>
    %c0_25 = arith.constant 0 : index
    %c0_26 = arith.constant 0 : index
    %c0_27 = arith.constant 0 : index
    %31 = vector.load %arg4[%c0_25, %c0_26, %c0_27] : memref<1x272x128xbf16, #tpu.memory_space<vmem>>, vector<1x272x128xbf16>
    %32 = vector.shape_cast %31 : vector<1x272x128xbf16> to vector<272x128xbf16>
    %33 = vector.shape_cast %30 : vector<272x128xbf16> to vector<1x272x128xbf16>
    tpu.vector_store %arg4[%c0_25, %c0_26, %c0_27], %33 {strides = array<i32>} : memref<1x272x128xbf16, #tpu.memory_space<vmem>>, vector<1x272x128xbf16>,
    return
  }
  func.func @transform_0(%arg0: i32) -> (i32, i32, i32) {
    %c0_i32 = arith.constant 0 : i32
    %c0_i32_0 = arith.constant 0 : i32
    %c0_i32_1 = arith.constant 0 : i32
    return %arg0, %c0_i32, %c0_i32_0 : i32, i32, i32
  }
  func.func @transform_1(%arg0: i32) -> (i32, i32, i32) {
    %c0_i32 = arith.constant 0 : i32
    %c0_i32_0 = arith.constant 0 : i32
    %c0_i32_1 = arith.constant 0 : i32
    %c0_i32_2 = arith.constant 0 : i32
    return %c0_i32, %c0_i32_0, %c0_i32_1 : i32, i32, i32
  }
  func.func @transform_2(%arg0: i32) -> (i32, i32) {
    %c0_i32 = arith.constant 0 : i32
    %c0_i32_0 = arith.constant 0 : i32
    %c0_i32_1 = arith.constant 0 : i32
    return %c0_i32, %c0_i32_0 : i32, i32
  }
  func.func @transform_3(%arg0: i32) -> (i32, i32, i32) {
    %c0_i32 = arith.constant 0 : i32
    %c0_i32_0 = arith.constant 0 : i32
    %c0_i32_1 = arith.constant 0 : i32
    return %arg0, %c0_i32, %c0_i32_0 : i32, i32, i32
  }
}

module attributes {stable_mosaic.version = 11 : i64} {
  func.func @body_head_kernel(%arg0: i32, %arg1: memref<1x88x64xbf16, #tpu.memory_space<vmem>>, %arg2: memref<4x64x128xbf16, #tpu.memory_space<vmem>>, %arg3: memref<1x128xf32, #tpu.memory_space<vmem>>, %arg4: memref<72x1xf32, #tpu.memory_space<vmem>>, %arg5: memref<128x128xf32, #tpu.memory_space<vmem>>, %arg6: memref<1x128xf32, #tpu.memory_space<vmem>>, %arg7: memref<1x1x128xf32, #tpu.memory_space<vmem>>) attributes {dimension_semantics = [#tpu.dimension_semantics<parallel>], iteration_bounds = array<i64: 2>, scalar_prefetch = 0 : i64, scratch_operands = 0 : i64, tpu.core_type = #tpu.core_type<tc>, window_params = [{transform_indices = @transform_0, window_bounds = array<i64: 1, 88, 64>}, {pipeline_mode = #tpu.pipeline_mode<synchronous>, transform_indices = @transform_1, window_bounds = array<i64: 4, 64, 128>}, {pipeline_mode = #tpu.pipeline_mode<synchronous>, transform_indices = @transform_2, window_bounds = array<i64: 1, 128>}, {pipeline_mode = #tpu.pipeline_mode<synchronous>, transform_indices = @transform_3, window_bounds = array<i64: 72, 1>}, {pipeline_mode = #tpu.pipeline_mode<synchronous>, transform_indices = @transform_4, window_bounds = array<i64: 128, 128>}, {pipeline_mode = #tpu.pipeline_mode<synchronous>, transform_indices = @transform_5, window_bounds = array<i64: 1, 128>}, {transform_indices = @transform_6, window_bounds = array<i64: 1, 1, 128>}]} {
    %cst = arith.constant 0.000000e+00 : f32
    %0 = vector.broadcast %cst : f32 to vector<72x128xf32>
    %c0 = arith.constant 0 : index
    %c0_0 = arith.constant 0 : index
    %c0_1 = arith.constant 0 : index
    %1 = vector.load %arg1[%c0, %c0_0, %c0_1] : memref<1x88x64xbf16, #tpu.memory_space<vmem>>, vector<1x72x64xbf16>
    %2 = vector.shape_cast %1 : vector<1x72x64xbf16> to vector<72x64xbf16>
    %c0_2 = arith.constant 0 : index
    %c0_3 = arith.constant 0 : index
    %c0_4 = arith.constant 0 : index
    %3 = vector.load %arg2[%c0_2, %c0_3, %c0_4] : memref<4x64x128xbf16, #tpu.memory_space<vmem>>, vector<1x64x128xbf16>
    %4 = vector.shape_cast %3 : vector<1x64x128xbf16> to vector<64x128xbf16>
    %cst_5 = arith.constant dense<0.000000e+00> : vector<72x128xf32>
    %5 = tpu.matmul %2, %4, %cst_5 {dimension_numbers = #tpu.dot_dimension_numbers<[1], [0], [0], [1], [0, 0, 1, 1], [], []>} : vector<72x64xbf16>, vector<64x128xbf16>, vector<72x128xf32> -> vector<72x128xf32>
    %6 = arith.addf %0, %5 : vector<72x128xf32>
    %c0_6 = arith.constant 0 : index
    %c1 = arith.constant 1 : index
    %c0_7 = arith.constant 0 : index
    %7 = vector.load %arg1[%c0_6, %c1, %c0_7] : memref<1x88x64xbf16, #tpu.memory_space<vmem>>, vector<1x72x64xbf16>
    %8 = vector.shape_cast %7 : vector<1x72x64xbf16> to vector<72x64xbf16>
    %c1_8 = arith.constant 1 : index
    %c0_9 = arith.constant 0 : index
    %c0_10 = arith.constant 0 : index
    %9 = vector.load %arg2[%c1_8, %c0_9, %c0_10] : memref<4x64x128xbf16, #tpu.memory_space<vmem>>, vector<1x64x128xbf16>
    %10 = vector.shape_cast %9 : vector<1x64x128xbf16> to vector<64x128xbf16>
    %cst_11 = arith.constant dense<0.000000e+00> : vector<72x128xf32>
    %11 = tpu.matmul %8, %10, %cst_11 {dimension_numbers = #tpu.dot_dimension_numbers<[1], [0], [0], [1], [0, 0, 1, 1], [], []>} : vector<72x64xbf16>, vector<64x128xbf16>, vector<72x128xf32> -> vector<72x128xf32>
    %12 = arith.addf %6, %11 : vector<72x128xf32>
    %c0_12 = arith.constant 0 : index
    %c9 = arith.constant 9 : index
    %c0_13 = arith.constant 0 : index
    %13 = vector.load %arg1[%c0_12, %c9, %c0_13] : memref<1x88x64xbf16, #tpu.memory_space<vmem>>, vector<1x72x64xbf16>
    %14 = vector.shape_cast %13 : vector<1x72x64xbf16> to vector<72x64xbf16>
    %c2 = arith.constant 2 : index
    %c0_14 = arith.constant 0 : index
    %c0_15 = arith.constant 0 : index
    %15 = vector.load %arg2[%c2, %c0_14, %c0_15] : memref<4x64x128xbf16, #tpu.memory_space<vmem>>, vector<1x64x128xbf16>
    %16 = vector.shape_cast %15 : vector<1x64x128xbf16> to vector<64x128xbf16>
    %cst_16 = arith.constant dense<0.000000e+00> : vector<72x128xf32>
    %17 = tpu.matmul %14, %16, %cst_16 {dimension_numbers = #tpu.dot_dimension_numbers<[1], [0], [0], [1], [0, 0, 1, 1], [], []>} : vector<72x64xbf16>, vector<64x128xbf16>, vector<72x128xf32> -> vector<72x128xf32>
    %18 = arith.addf %12, %17 : vector<72x128xf32>
    %c0_17 = arith.constant 0 : index
    %c10 = arith.constant 10 : index
    %c0_18 = arith.constant 0 : index
    %19 = vector.load %arg1[%c0_17, %c10, %c0_18] : memref<1x88x64xbf16, #tpu.memory_space<vmem>>, vector<1x72x64xbf16>
    %20 = vector.shape_cast %19 : vector<1x72x64xbf16> to vector<72x64xbf16>
    %c3 = arith.constant 3 : index
    %c0_19 = arith.constant 0 : index
    %c0_20 = arith.constant 0 : index
    %21 = vector.load %arg2[%c3, %c0_19, %c0_20] : memref<4x64x128xbf16, #tpu.memory_space<vmem>>, vector<1x64x128xbf16>
    %22 = vector.shape_cast %21 : vector<1x64x128xbf16> to vector<64x128xbf16>
    %cst_21 = arith.constant dense<0.000000e+00> : vector<72x128xf32>
    %23 = tpu.matmul %20, %22, %cst_21 {dimension_numbers = #tpu.dot_dimension_numbers<[1], [0], [0], [1], [0, 0, 1, 1], [], []>} : vector<72x64xbf16>, vector<64x128xbf16>, vector<72x128xf32> -> vector<72x128xf32>
    %24 = arith.addf %18, %23 : vector<72x128xf32>
    %c0_22 = arith.constant 0 : index
    %c0_23 = arith.constant 0 : index
    %25 = vector.load %arg3[%c0_22, %c0_23] : memref<1x128xf32, #tpu.memory_space<vmem>>, vector<1x128xf32>
    %26 = vector.broadcast %25 : vector<1x128xf32> to vector<72x128xf32>
    %27 = arith.addf %24, %26 : vector<72x128xf32>
    %cst_24 = arith.constant 0.000000e+00 : f32
    %28 = vector.broadcast %cst_24 : f32 to vector<72x128xf32>
    %29 = arith.maximumf %27, %28 : vector<72x128xf32>
    %c0_25 = arith.constant 0 : index
    %c0_26 = arith.constant 0 : index
    %30 = vector.load %arg4[%c0_25, %c0_26] : memref<72x1xf32, #tpu.memory_space<vmem>>, vector<72x1xf32>
    %31 = vector.broadcast %30 : vector<72x1xf32> to vector<72x128xf32>
    %32 = arith.mulf %29, %31 : vector<72x128xf32>
    %cst_27 = arith.constant dense<0.000000e+00> : vector<128xf32>
    %33 = vector.multi_reduction <add>, %32, %cst_27 [0] : vector<72x128xf32> to vector<128xf32>
    %34 = vector.shape_cast %33 : vector<128xf32> to vector<1x128xf32>
    %c0_28 = arith.constant 0 : index
    %c0_29 = arith.constant 0 : index
    %35 = vector.load %arg5[%c0_28, %c0_29] : memref<128x128xf32, #tpu.memory_space<vmem>>, vector<128x128xf32>
    %cst_30 = arith.constant dense<0.000000e+00> : vector<1x128xf32>
    %36 = tpu.matmul %34, %35, %cst_30 {dimension_numbers = #tpu.dot_dimension_numbers<[1], [0], [0], [1], [0, 0, 1, 1], [], []>} : vector<1x128xf32>, vector<128x128xf32>, vector<1x128xf32> -> vector<1x128xf32>
    %c0_31 = arith.constant 0 : index
    %c0_32 = arith.constant 0 : index
    %37 = vector.load %arg6[%c0_31, %c0_32] : memref<1x128xf32, #tpu.memory_space<vmem>>, vector<1x128xf32>
    %38 = arith.addf %36, %37 : vector<1x128xf32>
    %c0_33 = arith.constant 0 : index
    %c0_34 = arith.constant 0 : index
    %c0_35 = arith.constant 0 : index
    %39 = vector.load %arg7[%c0_33, %c0_34, %c0_35] : memref<1x1x128xf32, #tpu.memory_space<vmem>>, vector<1x1x128xf32>
    %40 = vector.shape_cast %39 : vector<1x1x128xf32> to vector<1x128xf32>
    %41 = vector.shape_cast %38 : vector<1x128xf32> to vector<1x1x128xf32>
    tpu.vector_store %arg7[%c0_33, %c0_34, %c0_35], %41 {strides = array<i32>} : memref<1x1x128xf32, #tpu.memory_space<vmem>>, vector<1x1x128xf32>,
    return
  }
  func.func @transform_0(%arg0: i32) -> (i32, i32, i32) {
    %c0_i32 = arith.constant 0 : i32
    %c0_i32_0 = arith.constant 0 : i32
    %c0_i32_1 = arith.constant 0 : i32
    return %arg0, %c0_i32, %c0_i32_0 : i32, i32, i32
  }
  func.func @transform_1(%arg0: i32) -> (i32, i32, i32) {
    %c0_i32 = arith.constant 0 : i32
    %c0_i32_0 = arith.constant 0 : i32
    %c0_i32_1 = arith.constant 0 : i32
    %c0_i32_2 = arith.constant 0 : i32
    return %c0_i32, %c0_i32_0, %c0_i32_1 : i32, i32, i32
  }
  func.func @transform_2(%arg0: i32) -> (i32, i32) {
    %c0_i32 = arith.constant 0 : i32
    %c0_i32_0 = arith.constant 0 : i32
    %c0_i32_1 = arith.constant 0 : i32
    return %c0_i32, %c0_i32_0 : i32, i32
  }
  func.func @transform_3(%arg0: i32) -> (i32, i32) {
    %c0_i32 = arith.constant 0 : i32
    %c0_i32_0 = arith.constant 0 : i32
    %c0_i32_1 = arith.constant 0 : i32
    return %c0_i32, %c0_i32_0 : i32, i32
  }
  func.func @transform_4(%arg0: i32) -> (i32, i32) {
    %c0_i32 = arith.constant 0 : i32
    %c0_i32_0 = arith.constant 0 : i32
    %c0_i32_1 = arith.constant 0 : i32
    return %c0_i32, %c0_i32_0 : i32, i32
  }
  func.func @transform_5(%arg0: i32) -> (i32, i32) {
    %c0_i32 = arith.constant 0 : i32
    %c0_i32_0 = arith.constant 0 : i32
    %c0_i32_1 = arith.constant 0 : i32
    return %c0_i32, %c0_i32_0 : i32, i32
  }
  func.func @transform_6(%arg0: i32) -> (i32, i32, i32) {
    %c0_i32 = arith.constant 0 : i32
    %c0_i32_0 = arith.constant 0 : i32
    %c0_i32_1 = arith.constant 0 : i32
    return %arg0, %c0_i32, %c0_i32_0 : i32, i32, i32
  }
}

</mosaic_0001>

<llo_original>
// kernel: general_net_forward_clf.2
$region0: #{general_net_forward_clf.2}
  #allocation0 [shape = 'u32[]', space=smem, size = 0x4, offset = 0x4, fixed_abs, tag = 'smem constant byte address 0x4 - core index']
  #allocation1 [shape = 'u32[72,128]{1,0:T(1,128)}', space=vmem, size = 0x9000, scoped, tag = 'internal scratch']
  %s0 = inlined_call_operand.vmem [shape: bf16[2,296,32], index: 0, kind: input, shape index: {}]
  %s1 = inlined_call_operand.vmem [shape: bf16[4,32,128], index: 1, kind: input, shape index: {}]
  %s2 = inlined_call_operand.vmem [shape: f32[1,128], index: 2, kind: input, shape index: {}]
  %s3 = inlined_call_operand.vmem [shape: bf16[2,272,128], index: 3, kind: output, shape index: {}]
  %s4 = sld [smem:[#allocation0]]
  $region45: #{general_net_forward_clf.2} parent=0
    _
  %s6 = ssub.s32 1, %s4
  %s7 = scalar_select 0, %s6, %s4
  loop: start=0, step=1, limit=4
  $region2: #{general_net_forward_clf.2} parent=0 // loop_pre_header
    _
  $region3: #{general_net_forward_clf.2} parent=0 // loop_header
    %s9 = sphi 0, %s13
    %p10 = scmp.ge.s32.totalorder %s9, 4
    %s19 = sphi 0, %s21
    %s22 = sphi 0, %s19
    %s23 = sphi 0, %s22
    %s39 = sphi 0, %s23
    %s43 = sphi 0, %s43
    %s45 = sphi 0, %s43
    %s46 = sphi 0, %s45
    %s60 = sphi 0, %s46
    %s64 = sphi 0, %s64
    %s66 = sphi 0, %s64
    %s67 = sphi 0, %s66
    %s81 = sphi 0, %s67
    %s87 = sphi 0, %s89
    %s90 = sphi 0, %s87
    %s91 = sphi 0, %s90
    %s107 = sphi 0, %s91
  $region4: #{general_net_forward_clf.2} parent=0 // loop_header_branch
    %12 = sbr.rel (%p10) target = $region8
  $region5: #{general_net_forward_clf.2} parent=0 // loop_body
    %s14 = ssub.s32 %s9, 1
    %s15 = ssub.s32 %s9, 2
    %s16 = sadd.s32 %s9, 1
    %s17 = ssub.s32 %s9, %s16
    %p18 = scmp.eq.s32.totalorder %s17, 0
    %s20 = sadd.s32 %s19, 1
    %s21 = scalar_select %p18, %s19, %s20
    %p24 = pneg %p18
    %p25 = scmp.eq.s32.totalorder %s9, 1
    %p26 = por %p24, %p25
    %p27 = scmp.ne.s32.totalorder %s19, %s22
    %p28 = scmp.eq.s32.totalorder %s9, 0
    %p29 = por %p27, %p28
    %p30 = scmp.ne.s32.totalorder %s19, %s22
    %p31 = scmp.eq.s32.totalorder %s14, 1
    %p32 = por %p30, %p31
    %p33 = scmp.ne.s32.totalorder %s22, %s23
    %p34 = scmp.eq.s32.totalorder %s14, 0
    %p35 = por %p33, %p34
    %p36 = scmp.ne.s32.totalorder %s22, %s23
    %p37 = scmp.eq.s32.totalorder %s15, 1
    %p38 = por %p36, %p37
    %p40 = scmp.ne.s32.totalorder %s23, %s39
    %p41 = scmp.eq.s32.totalorder %s15, 0
    %p42 = por %p40, %p41
    %s44 = sadd.s32 %s43, 1
    %p47 = scmp.eq.s32.totalorder %s9, 1
    %p48 = scmp.ne.s32.totalorder %s43, %s45
    %p49 = scmp.eq.s32.totalorder %s9, 0
    %p50 = por %p48, %p49
    %p51 = scmp.ne.s32.totalorder %s43, %s45
    %p52 = scmp.eq.s32.totalorder %s14, 1
    %p53 = por %p51, %p52
    %p54 = scmp.ne.s32.totalorder %s45, %s46
    %p55 = scmp.eq.s32.totalorder %s14, 0
    %p56 = por %p54, %p55
    %p57 = scmp.ne.s32.totalorder %s45, %s46
    %p58 = scmp.eq.s32.totalorder %s15, 1
    %p59 = por %p57, %p58
    %p61 = scmp.ne.s32.totalorder %s46, %s60
    %p62 = scmp.eq.s32.totalorder %s15, 0
    %p63 = por %p61, %p62
    %s65 = sadd.s32 %s64, 1
    %p68 = scmp.eq.s32.totalorder %s9, 1
    %p69 = scmp.ne.s32.totalorder %s64, %s66
    %p70 = scmp.eq.s32.totalorder %s9, 0
    %p71 = por %p69, %p70
    %p72 = scmp.ne.s32.totalorder %s64, %s66
    %p73 = scmp.eq.s32.totalorder %s14, 1
    %p74 = por %p72, %p73
    %p75 = scmp.ne.s32.totalorder %s66, %s67
    %p76 = scmp.eq.s32.totalorder %s14, 0
    %p77 = por %p75, %p76
    %p78 = scmp.ne.s32.totalorder %s66, %s67
    %p79 = scmp.eq.s32.totalorder %s15, 1
    %p80 = por %p78, %p79
    %p82 = scmp.ne.s32.totalorder %s67, %s81
    %p83 = scmp.eq.s32.totalorder %s15, 0
    %p84 = por %p82, %p83
    %s85 = ssub.s32 %s9, %s16
    %p86 = scmp.eq.s32.totalorder %s85, 0
    %s88 = sadd.s32 %s87, 1
    %s89 = scalar_select %p86, %s87, %s88
    %p92 = pneg %p86
    %p93 = scmp.eq.s32.totalorder %s9, 1
    %p94 = por %p92, %p93
    %p95 = scmp.ne.s32.totalorder %s87, %s90
    %p96 = scmp.eq.s32.totalorder %s9, 0
    %p97 = por %p95, %p96
    %p98 = scmp.ne.s32.totalorder %s87, %s90
    %p99 = scmp.eq.s32.totalorder %s14, 1
    %p100 = por %p98, %p99
    %p101 = scmp.ne.s32.totalorder %s90, %s91
    %p102 = scmp.eq.s32.totalorder %s14, 0
    %p103 = por %p101, %p102
    %p104 = scmp.ne.s32.totalorder %s90, %s91
    %p105 = scmp.eq.s32.totalorder %s15, 1
    %p106 = por %p104, %p105
    %p108 = scmp.ne.s32.totalorder %s91, %s107
    %p109 = scmp.eq.s32.totalorder %s15, 0
    %p110 = por %p108, %p109
    %p111 = scmp.le.s32.totalorder 1, %s9
    %p112 = scmp.lt.s32.totalorder %s9, 3
    %p113 = pnand %p111, %p112
    %p114 = pneg %p113
    // Predicated region
    $region9: #{general_net_forward_clf.2} parent=5 // pred_check
      _
    $region10: #{general_net_forward_clf.2} parent=5 // pred_check_branch
      %116 = sbr.rel (%p113) target = $region12
    $region11: #{general_net_forward_clf.2} parent=5 // pred_region
      %s117 = ssub.s32 %s9, 1
      // Predicated region
      $region13: #{general_net_forward_clf.2} parent=11 // pred_check
        %p118 = pneg %p56
      $region14: #{general_net_forward_clf.2} parent=11 // pred_check_branch
        %120 = sbr.rel (%p118) target = $region16
      $region15: #{general_net_forward_clf.2} parent=11 // pred_region
        _
      $region16: #{general_net_forward_clf.2} parent=11 // pred_fallthru
        _
      // Predicated region
      $region17: #{general_net_forward_clf.2} parent=11 // pred_check
        %p121 = pneg %p77
      $region18: #{general_net_forward_clf.2} parent=11 // pred_check_branch
        %123 = sbr.rel (%p121) target = $region20
      $region19: #{general_net_forward_clf.2} parent=11 // pred_region
        _
      $region20: #{general_net_forward_clf.2} parent=11 // pred_fallthru
        _
    $region12: #{general_net_forward_clf.2} parent=5 // pred_fallthru
      _
    %p124 = scmp.lt.s32.totalorder %s9, 2
    // Predicated region
    $region21: #{general_net_forward_clf.2} parent=5 // pred_check
      %p125 = pneg %p124
    $region22: #{general_net_forward_clf.2} parent=5 // pred_check_branch
      %127 = sbr.rel (%p125) target = $region24
    $region23: #{general_net_forward_clf.2} parent=5 // pred_region
      // Predicated region
      $region25: #{general_net_forward_clf.2} parent=23 // pred_check
        %p128 = pneg %p29
      $region26: #{general_net_forward_clf.2} parent=23 // pred_check_branch
        %130 = sbr.rel (%p128) target = $region28
      $region27: #{general_net_forward_clf.2} parent=23 // pred_region
        %p131 = scmp.lt.s32.totalorder %s9, 1
        %s132 = scalar_select %p131, %s9, 1
        %s133 = smul.addr %s132, 37
        %s134 = smul.addr %s133, 4
        %s135 = scalar_lea.vmem %s0, %s134
      $region28: #{general_net_forward_clf.2} parent=23 // pred_fallthru
        _
    $region24: #{general_net_forward_clf.2} parent=5 // pred_fallthru
      _
    %p136 = scmp.le.s32.totalorder 1, %s9
    %p137 = scmp.lt.s32.totalorder %s9, 3
    %p138 = pnand %p136, %p137
    %p139 = pneg %p138
    // Predicated region
    $region29: #{general_net_forward_clf.2} parent=5 // pred_check
      _
    $region30: #{general_net_forward_clf.2} parent=5 // pred_check_branch
      %141 = sbr.rel (%p138) target = $region32
    $region31: #{general_net_forward_clf.2} parent=5 // pred_region
      %s142 = ssub.s32 %s9, 1
      %p143 = scmp.lt.s32.totalorder %s14, 1
      %s144 = scalar_select %p143, %s14, 1
      %s145 = smul.addr %s144, 37
      %s146 = smul.addr %s145, 4
      %s147 = scalar_lea.vmem %s0, %s146
      %p148 = pneg %p35
      %p149 = pneg %p32
      %p150 = pneg %p56
      %p151 = pneg %p53
      %p152 = pneg %p77
      %p153 = pneg %p74
      %p154 = pneg %p103
      %p155 = pneg %p100
      %p156 = scmp.lt.s32.totalorder %s14, 1
      %s157 = scalar_select %p156, %s14, 1
      %s158 = smul.addr %s157, 34
      %s159 = smul.addr %s158, 4
      %s160 = scalar_lea.vmem %s3, %s159
      %p161 = scmp.lt.s32.totalorder %s14, 1
      %s162 = scalar_select %p161, %s14, 1
      %s163 = smul.addr %s162, 37
      %s164 = smul.addr %s163, 4
      %s165 = scalar_lea.vmem %s0, %s164
      %p166 = scmp.lt.s32.totalorder %s14, 1
      %s167 = scalar_select %p166, %s14, 1
      %s168 = smul.addr %s167, 34
      %s169 = smul.addr %s168, 4
      %s170 = scalar_lea.vmem %s3, %s169
      %v172 = vld [vmem:[%s165] sm:$0xf]
      %v173 = vld [vmem:[%s165 + $0x4] sm:$0xf]
      %v174 = vld [vmem:[%s165 + $0x8] sm:$0xf]
      %v175 = vld [vmem:[%s165 + $0xc] sm:$0xf]
      %v176 = vld [vmem:[%s165 + $0x10] sm:$0xf]
      %v177 = vld [vmem:[%s165 + $0x14] sm:$0xf]
      %v178 = vld [vmem:[%s165 + $0x18] sm:$0xf]
      %v179 = vld [vmem:[%s165 + $0x1c] sm:$0xf]
      %v180 = vld [vmem:[%s165 + $0x20] sm:$0xf]
      %v181 = vld [vmem:[%s165 + $0x24] sm:$0xf]
      %v182 = vld [vmem:[%s165 + $0x28] sm:$0xf]
      %v183 = vld [vmem:[%s165 + $0x2c] sm:$0xf]
      %v184 = vld [vmem:[%s165 + $0x30] sm:$0xf]
      %v185 = vld [vmem:[%s165 + $0x34] sm:$0xf]
      %v186 = vld [vmem:[%s165 + $0x38] sm:$0xf]
      %v187 = vld [vmem:[%s165 + $0x3c] sm:$0xf]
      %v188 = vld [vmem:[%s165 + $0x40] sm:$0xf]
      %v189 = vld [vmem:[%s165 + $0x44] sm:$0xf]
      %v190 = vld [vmem:[%s165 + $0x48] sm:$0xf]
      %v191 = vld [vmem:[%s165 + $0x4c] sm:$0xf]
      %v192 = vld [vmem:[%s165 + $0x50] sm:$0xf]
      %v193 = vld [vmem:[%s165 + $0x54] sm:$0xf]
      %v194 = vld [vmem:[%s165 + $0x58] sm:$0xf]
      %v195 = vld [vmem:[%s165 + $0x5c] sm:$0xf]
      %v196 = vld [vmem:[%s165 + $0x60] sm:$0xf]
      %v197 = vld [vmem:[%s165 + $0x64] sm:$0xf]
      %v198 = vld [vmem:[%s165 + $0x68] sm:$0xf]
      %v199 = vld [vmem:[%s165 + $0x6c] sm:$0xf]
      %v200 = vld [vmem:[%s165 + $0x70] sm:$0xf]
      %v201 = vld [vmem:[%s165 + $0x74] sm:$0xf]
      %v202 = vld [vmem:[%s165 + $0x78] sm:$0xf]
      %v203 = vld [vmem:[%s165 + $0x7c] sm:$0xf]
      %v204 = vld [vmem:[%s165 + $0x80] sm:$0xf]
      %v205 = vld [vmem:[%s165 + $0x84] sm:$0xf]
      %v206 = vld [vmem:[%s1] sm:$0xf]
      %v207 = vld [vmem:[%s1 + $0x4] sm:$0xf]
      %v208 = vld [vmem:[%s1 + $0x8] sm:$0xf]
      %v209 = vld [vmem:[%s1 + $0xc] sm:$0xf]
      %v210 = vld [vmem:[%s165 + $0x88] sm:$0x1]
      %s211 = scalar_lea.vmem %s1, 16
      %v212 = vld [vmem:[%s211] sm:$0xf]
      %v213 = vld [vmem:[%s211 + $0x4] sm:$0xf]
      %v214 = vld [vmem:[%s211 + $0x8] sm:$0xf]
      %v215 = vld [vmem:[%s211 + $0xc] sm:$0xf]
      %v251 = vunpack.c.l.b16 %v172
      %v252 = vunpack.c.l.b16 %v173
      %v253 = vunpack.c.l.b16 %v174
      %v254 = vunpack.c.l.b16 %v175
      %v255 = vunpack.c.l.b16 %v176
      %v256 = vunpack.c.l.b16 %v177
      %v257 = vunpack.c.l.b16 %v178
      %v258 = vunpack.c.l.b16 %v179
      %v259 = vunpack.c.l.b16 %v180
      %v260 = vunpack.c.l.b16 %v181
      %v261 = vunpack.c.l.b16 %v182
      %v262 = vunpack.c.l.b16 %v183
      %v263 = vunpack.c.l.b16 %v184
      %v264 = vunpack.c.l.b16 %v185
      %v265 = vunpack.c.l.b16 %v186
      %v266 = vunpack.c.l.b16 %v187
      %v267 = vunpack.c.l.b16 %v188
      %v268 = vunpack.c.l.b16 %v189
      %v269 = vunpack.c.l.b16 %v190
      %v270 = vunpack.c.l.b16 %v191
      %v271 = vunpack.c.l.b16 %v192
      %v272 = vunpack.c.l.b16 %v193
      %v273 = vunpack.c.l.b16 %v194
      %v274 = vunpack.c.l.b16 %v195
      %v275 = vunpack.c.l.b16 %v196
      %v276 = vunpack.c.l.b16 %v197
      %v277 = vunpack.c.l.b16 %v198
      %v278 = vunpack.c.l.b16 %v199
      %v279 = vunpack.c.l.b16 %v200
      %v280 = vunpack.c.l.b16 %v201
      %v281 = vunpack.c.l.b16 %v202
      %v282 = vunpack.c.l.b16 %v203
      %v283 = vunpack.c.l.b16 %v204
      %v284 = vunpack.c.l.b16 %v205
      %v285 = vunpack.c.l.b16 %v210
      %v286 = vpack.c.b16 %v252, %v251
      %v287 = vpack.c.b16 %v254, %v253
      %v288 = vpack.c.b16 %v256, %v255
      %v289 = vpack.c.b16 %v258, %v257
      %v290 = vpack.c.b16 %v260, %v259
      %v291 = vpack.c.b16 %v262, %v261
      %v292 = vpack.c.b16 %v264, %v263
      %v293 = vpack.c.b16 %v266, %v265
      %v294 = vpack.c.b16 %v268, %v267
      %v295 = vpack.c.b16 %v270, %v269
      %v296 = vpack.c.b16 %v272, %v271
      %v297 = vpack.c.b16 %v274, %v273
      %v298 = vpack.c.b16 %v276, %v275
      %v299 = vpack.c.b16 %v278, %v277
      %v300 = vpack.c.b16 %v280, %v279
      %v301 = vpack.c.b16 %v282, %v281
      %v302 = vpack.c.b16 %v284, %v283
      %v303 = vpack.c.b16 %v285, %v285
      %vm304 = vsmask.f32 7424
      %v306 = vshrl.u32 %v286, 16
      %v308 = vshll.u32 %v286, 16
      %v310 = vrot.slane %v308, 1
      %v311 = vor.u32 %v306, %v310
      %v313 = vshll.u32 %v287, 16
      %v315 = vrot.slane %v313, 1
      %v316 = vsel %vm304, %v311, %v315
      %v317 = vshrl.u32 %v287, 16
      %v319 = vor.u32 %v317, %v315
      %v321 = vshll.u32 %v288, 16
      %v323 = vrot.slane %v321, 1
      %v324 = vsel %vm304, %v319, %v323
      %v325 = vshrl.u32 %v288, 16
      %v327 = vor.u32 %v325, %v323
      %v329 = vshll.u32 %v289, 16
      %v331 = vrot.slane %v329, 1
      %v332 = vsel %vm304, %v327, %v331
      %v333 = vshrl.u32 %v289, 16
      %v335 = vor.u32 %v333, %v331
      %v337 = vshll.u32 %v290, 16
      %v339 = vrot.slane %v337, 1
      %v340 = vsel %vm304, %v335, %v339
      %v341 = vshrl.u32 %v290, 16
      %v343 = vor.u32 %v341, %v339
      %v345 = vshll.u32 %v291, 16
      %v347 = vrot.slane %v345, 1
      %v348 = vsel %vm304, %v343, %v347
      %v349 = vshrl.u32 %v291, 16
      %v351 = vor.u32 %v349, %v347
      %v353 = vshll.u32 %v292, 16
      %v355 = vrot.slane %v353, 1
      %v356 = vsel %vm304, %v351, %v355
      %v357 = vshrl.u32 %v292, 16
      %v359 = vor.u32 %v357, %v355
      %v361 = vshll.u32 %v293, 16
      %v363 = vrot.slane %v361, 1
      %v364 = vsel %vm304, %v359, %v363
      %v365 = vshrl.u32 %v293, 16
      %v367 = vor.u32 %v365, %v363
      %v369 = vshll.u32 %v294, 16
      %v371 = vrot.slane %v369, 1
      %v372 = vsel %vm304, %v367, %v371
      %v373 = vshrl.u32 %v294, 16
      %v375 = vor.u32 %v373, %v371
      %v377 = vshll.u32 %v295, 16
      %v379 = vrot.slane %v377, 1
      %v380 = vsel %vm304, %v375, %v379
      %v381 = vshrl.u32 %v295, 16
      %v383 = vor.u32 %v381, %v379
      %v385 = vshll.u32 %v296, 16
      %v387 = vrot.slane %v385, 1
      %v388 = vsel %vm304, %v383, %v387
      %v389 = vshrl.u32 %v296, 16
      %v391 = vor.u32 %v389, %v387
      %v393 = vshll.u32 %v297, 16
      %v395 = vrot.slane %v393, 1
      %v396 = vsel %vm304, %v391, %v395
      %v397 = vshrl.u32 %v297, 16
      %v399 = vor.u32 %v397, %v395
      %v401 = vshll.u32 %v298, 16
      %v403 = vrot.slane %v401, 1
      %v404 = vsel %vm304, %v399, %v403
      %v405 = vshrl.u32 %v298, 16
      %v407 = vor.u32 %v405, %v403
      %v409 = vshll.u32 %v299, 16
      %v411 = vrot.slane %v409, 1
      %v412 = vsel %vm304, %v407, %v411
      %v413 = vshrl.u32 %v299, 16
      %v415 = vor.u32 %v413, %v411
      %v417 = vshll.u32 %v300, 16
      %v419 = vrot.slane %v417, 1
      %v420 = vsel %vm304, %v415, %v419
      %v421 = vshrl.u32 %v300, 16
      %v423 = vor.u32 %v421, %v419
      %v425 = vshll.u32 %v301, 16
      %v427 = vrot.slane %v425, 1
      %v428 = vsel %vm304, %v423, %v427
      %v429 = vshrl.u32 %v301, 16
      %v431 = vor.u32 %v429, %v427
      %v433 = vshll.u32 %v302, 16
      %v435 = vrot.slane %v433, 1
      %v436 = vsel %vm304, %v431, %v435
      %v437 = vshrl.u32 %v302, 16
      %v439 = vor.u32 %v437, %v435
      %v441 = vshll.u32 %v303, 16
      %v443 = vrot.slane %v441, 1
      %v444 = vsel %vm304, %v439, %v443
      %v449 = vunpack.c.l.b16 %v212
      %v450 = vunpack.c.l.b16 %v213
      %v451 = vunpack.c.l.b16 %v214
      %v452 = vunpack.c.l.b16 %v215
      %v453 = vpack.c.b16 %v450, %v449
      %v454 = vpack.c.b16 %v452, %v451
      %vm457 = vcmask 261120
      %v459 = vsel %vm457, %v316, 0
      %v462 = vsel %vm457, %v324, 0
      %v465 = vsel %vm457, %v332, 0
      %v468 = vsel %vm457, %v340, 0
      %v471 = vsel %vm457, %v348, 0
      %v474 = vsel %vm457, %v356, 0
      %v477 = vsel %vm457, %v364, 0
      %v480 = vsel %vm457, %v372, 0
      %v483 = vsel %vm457, %v380, 0
      %v486 = vsel %vm457, %v388, 0
      %v489 = vsel %vm457, %v396, 0
      %v492 = vsel %vm457, %v404, 0
      %v495 = vsel %vm457, %v412, 0
      %v498 = vsel %vm457, %v420, 0
      %v501 = vsel %vm457, %v428, 0
      %v504 = vsel %vm457, %v436, 0
      %v507 = vsel %vm457, %v444, 0
      %509 = vmatpush.bf16.msra.mxu0 0
      %510 = vmatpush.bf16.msra.mxu0 0
      %511 = vmatpush.bf16.msra.mxu0 0
      %512 = vmatpush.bf16.msra.mxu0 0
      %513 = vmatpush.bf16.msra.mxu0 0
      %514 = vmatpush.bf16.msra.mxu0 0
      %515 = vmatpush.bf16.msra.mxu0 %v454
      %516 = vmatpush.bf16.msra.mxu0 %v453
      %517 = vmatmul.bf16.gmra.mxu0 %v459
      %v518 = vpop.f32.mrf.mxu0
      %v519 = vadd.f32 0.0, %v518
      %v520 = vpop.f32.mrf.mxu0
      %v521 = vadd.f32 0.0, %v520
      %522 = vmatmul.bf16.gmra.mxu0 %v462
      %v523 = vpop.f32.mrf.mxu0
      %v524 = vadd.f32 0.0, %v523
      %v525 = vpop.f32.mrf.mxu0
      %v526 = vadd.f32 0.0, %v525
      %527 = vmatmul.bf16.gmra.mxu0 %v465
      %v528 = vpop.f32.mrf.mxu0
      %v529 = vadd.f32 0.0, %v528
      %v530 = vpop.f32.mrf.mxu0
      %v531 = vadd.f32 0.0, %v530
      %532 = vmatmul.bf16.gmra.mxu0 %v468
      %v533 = vpop.f32.mrf.mxu0
      %v534 = vadd.f32 0.0, %v533
      %v535 = vpop.f32.mrf.mxu0
      %v536 = vadd.f32 0.0, %v535
      %537 = vmatmul.bf16.gmra.mxu0 %v471
      %v538 = vpop.f32.mrf.mxu0
      %v539 = vadd.f32 0.0, %v538
      %v540 = vpop.f32.mrf.mxu0
      %v541 = vadd.f32 0.0, %v540
      %542 = vmatmul.bf16.gmra.mxu0 %v474
      %v543 = vpop.f32.mrf.mxu0
      %v544 = vadd.f32 0.0, %v543
      %v545 = vpop.f32.mrf.mxu0
      %v546 = vadd.f32 0.0, %v545
      %547 = vmatmul.bf16.gmra.mxu0 %v477
      %v548 = vpop.f32.mrf.mxu0
      %v549 = vadd.f32 0.0, %v548
      %v550 = vpop.f32.mrf.mxu0
      %v551 = vadd.f32 0.0, %v550
      %552 = vmatmul.bf16.gmra.mxu0 %v480
      %v553 = vpop.f32.mrf.mxu0
      %v554 = vadd.f32 0.0, %v553
      %v555 = vpop.f32.mrf.mxu0
      %v556 = vadd.f32 0.0, %v555
      %557 = vmatmul.bf16.gmra.mxu0 %v483
      %v558 = vpop.f32.mrf.mxu0
      %v559 = vadd.f32 0.0, %v558
      %v560 = vpop.f32.mrf.mxu0
      %v561 = vadd.f32 0.0, %v560
      %562 = vmatmul.bf16.gmra.mxu0 %v486
      %v563 = vpop.f32.mrf.mxu0
      %v564 = vadd.f32 0.0, %v563
      %v565 = vpop.f32.mrf.mxu0
      %v566 = vadd.f32 0.0, %v565
      %567 = vmatmul.bf16.gmra.mxu0 %v489
      %v568 = vpop.f32.mrf.mxu0
      %v569 = vadd.f32 0.0, %v568
      %v570 = vpop.f32.mrf.mxu0
      %v571 = vadd.f32 0.0, %v570
      %572 = vmatmul.bf16.gmra.mxu0 %v492
      %v573 = vpop.f32.mrf.mxu0
      %v574 = vadd.f32 0.0, %v573
      %v575 = vpop.f32.mrf.mxu0
      %v576 = vadd.f32 0.0, %v575
      %577 = vmatmul.bf16.gmra.mxu0 %v495
      %v578 = vpop.f32.mrf.mxu0
      %v579 = vadd.f32 0.0, %v578
      %v580 = vpop.f32.mrf.mxu0
      %v581 = vadd.f32 0.0, %v580
      %582 = vmatmul.bf16.gmra.mxu0 %v498
      %v583 = vpop.f32.mrf.mxu0
      %v584 = vadd.f32 0.0, %v583
      %v585 = vpop.f32.mrf.mxu0
      %v586 = vadd.f32 0.0, %v585
      %587 = vmatmul.bf16.gmra.mxu0 %v501
      %v588 = vpop.f32.mrf.mxu0
      %v589 = vadd.f32 0.0, %v588
      %v590 = vpop.f32.mrf.mxu0
      %v591 = vadd.f32 0.0, %v590
      %592 = vmatmul.bf16.gmra.mxu0 %v504
      %v593 = vpop.f32.mrf.mxu0
      %v594 = vadd.f32 0.0, %v593
      %v595 = vpop.f32.mrf.mxu0
      %v596 = vadd.f32 0.0, %v595
      %597 = vmatmul.bf16.gmra.mxu0 %v507
      %v598 = vpop.f32.mrf.mxu0
      %v599 = vadd.f32 0.0, %v598
      %v600 = vpop.f32.mrf.mxu0
      %v601 = vadd.f32 0.0, %v600
      %602 = vdwg.mxu0
      %v607 = vunpack.c.l.b16 %v206
      %v608 = vunpack.c.l.b16 %v207
      %v609 = vunpack.c.l.b16 %v208
      %v610 = vunpack.c.l.b16 %v209
      %v611 = vpack.c.b16 %v608, %v607
      %v612 = vpack.c.b16 %v610, %v609
      %v615 = vsel %vm457, %v286, 0
      %v617 = vsel %vm457, %v287, 0
      %v619 = vsel %vm457, %v288, 0
      %v621 = vsel %vm457, %v289, 0
      %v623 = vsel %vm457, %v290, 0
      %v625 = vsel %vm457, %v291, 0
      %v627 = vsel %vm457, %v292, 0
      %v629 = vsel %vm457, %v293, 0
      %v631 = vsel %vm457, %v294, 0
      %v633 = vsel %vm457, %v295, 0
      %v635 = vsel %vm457, %v296, 0
      %v637 = vsel %vm457, %v297, 0
      %v639 = vsel %vm457, %v298, 0
      %v641 = vsel %vm457, %v299, 0
      %v643 = vsel %vm457, %v300, 0
      %v645 = vsel %vm457, %v301, 0
      %v647 = vsel %vm457, %v302, 0
      %649 = vmatpush.bf16.msra.mxu0 0
      %650 = vmatpush.bf16.msra.mxu0 0
      %651 = vmatpush.bf16.msra.mxu0 0
      %652 = vmatpush.bf16.msra.mxu0 0
      %653 = vmatpush.bf16.msra.mxu0 0
      %654 = vmatpush.bf16.msra.mxu0 0
      %655 = vmatpush.bf16.msra.mxu0 %v612
      %656 = vmatpush.bf16.msra.mxu0 %v611
      %657 = vmatmul.bf16.gmra.mxu0 %v615
      %v658 = vpop.f32.mrf.mxu0
      %v659 = vadd.f32 %v519, %v658
      %v660 = vpop.f32.mrf.mxu0
      %v661 = vadd.f32 %v521, %v660
      %662 = vmatmul.bf16.gmra.mxu0 %v617
      %v663 = vpop.f32.mrf.mxu0
      %v664 = vadd.f32 %v524, %v663
      %v665 = vpop.f32.mrf.mxu0
      %v666 = vadd.f32 %v526, %v665
      %667 = vmatmul.bf16.gmra.mxu0 %v619
      %v668 = vpop.f32.mrf.mxu0
      %v669 = vadd.f32 %v529, %v668
      %v670 = vpop.f32.mrf.mxu0
      %v671 = vadd.f32 %v531, %v670
      %672 = vmatmul.bf16.gmra.mxu0 %v621
      %v673 = vpop.f32.mrf.mxu0
      %v674 = vadd.f32 %v534, %v673
      %v675 = vpop.f32.mrf.mxu0
      %v676 = vadd.f32 %v536, %v675
      %677 = vmatmul.bf16.gmra.mxu0 %v623
      %v678 = vpop.f32.mrf.mxu0
      %v679 = vadd.f32 %v539, %v678
      %v680 = vpop.f32.mrf.mxu0
      %v681 = vadd.f32 %v541, %v680
      %682 = vmatmul.bf16.gmra.mxu0 %v625
      %v683 = vpop.f32.mrf.mxu0
      %v684 = vadd.f32 %v544, %v683
      %v685 = vpop.f32.mrf.mxu0
      %v686 = vadd.f32 %v546, %v685
      %687 = vmatmul.bf16.gmra.mxu0 %v627
      %v688 = vpop.f32.mrf.mxu0
      %v689 = vadd.f32 %v549, %v688
      %v690 = vpop.f32.mrf.mxu0
      %v691 = vadd.f32 %v551, %v690
      %692 = vmatmul.bf16.gmra.mxu0 %v629
      %v693 = vpop.f32.mrf.mxu0
      %v694 = vadd.f32 %v554, %v693
      %v695 = vpop.f32.mrf.mxu0
      %v696 = vadd.f32 %v556, %v695
      %697 = vmatmul.bf16.gmra.mxu0 %v631
      %v698 = vpop.f32.mrf.mxu0
      %v699 = vadd.f32 %v559, %v698
      %v700 = vpop.f32.mrf.mxu0
      %v701 = vadd.f32 %v561, %v700
      %702 = vmatmul.bf16.gmra.mxu0 %v633
      %v703 = vpop.f32.mrf.mxu0
      %v704 = vadd.f32 %v564, %v703
      %v705 = vpop.f32.mrf.mxu0
      %v706 = vadd.f32 %v566, %v705
      %707 = vmatmul.bf16.gmra.mxu0 %v635
      %v708 = vpop.f32.mrf.mxu0
      %v709 = vadd.f32 %v569, %v708
      %v710 = vpop.f32.mrf.mxu0
      %v711 = vadd.f32 %v571, %v710
      %712 = vmatmul.bf16.gmra.mxu0 %v637
      %v713 = vpop.f32.mrf.mxu0
      %v714 = vadd.f32 %v574, %v713
      %v715 = vpop.f32.mrf.mxu0
      %v716 = vadd.f32 %v576, %v715
      %717 = vmatmul.bf16.gmra.mxu0 %v639
      %v718 = vpop.f32.mrf.mxu0
      %v719 = vadd.f32 %v579, %v718
      %v720 = vpop.f32.mrf.mxu0
      %v721 = vadd.f32 %v581, %v720
      %722 = vmatmul.bf16.gmra.mxu0 %v641
      %v723 = vpop.f32.mrf.mxu0
      %v724 = vadd.f32 %v584, %v723
      %v725 = vpop.f32.mrf.mxu0
      %v726 = vadd.f32 %v586, %v725
      %727 = vmatmul.bf16.gmra.mxu0 %v643
      %v728 = vpop.f32.mrf.mxu0
      %v729 = vadd.f32 %v589, %v728
      %v730 = vpop.f32.mrf.mxu0
      %v731 = vadd.f32 %v591, %v730
      %732 = vmatmul.bf16.gmra.mxu0 %v645
      %v733 = vpop.f32.mrf.mxu0
      %v734 = vadd.f32 %v594, %v733
      %v735 = vpop.f32.mrf.mxu0
      %v736 = vadd.f32 %v596, %v735
      %737 = vmatmul.bf16.gmra.mxu0 %v647
      %v738 = vpop.f32.mrf.mxu0
      %v739 = vadd.f32 %v599, %v738
      %v740 = vpop.f32.mrf.mxu0
      %v741 = vadd.f32 %v601, %v740
      %742 = vdwg.mxu0
      %v743 = vld [vmem:[%s165 + $0x8] sm:$0xf]
      %v744 = vld [vmem:[%s165 + $0xc] sm:$0xf]
      %v745 = vld [vmem:[%s165 + $0x10] sm:$0xf]
      %v746 = vld [vmem:[%s165 + $0x14] sm:$0xf]
      %v747 = vld [vmem:[%s165 + $0x18] sm:$0xf]
      %v748 = vld [vmem:[%s165 + $0x1c] sm:$0xf]
      %v749 = vld [vmem:[%s165 + $0x20] sm:$0xf]
      %v750 = vld [vmem:[%s165 + $0x24] sm:$0xf]
      %v751 = vld [vmem:[%s165 + $0x28] sm:$0xf]
      %v752 = vld [vmem:[%s165 + $0x2c] sm:$0xf]
      %v753 = vld [vmem:[%s165 + $0x30] sm:$0xf]
      %v754 = vld [vmem:[%s165 + $0x34] sm:$0xf]
      %v755 = vld [vmem:[%s165 + $0x38] sm:$0xf]
      %v756 = vld [vmem:[%s165 + $0x3c] sm:$0xf]
      %v757 = vld [vmem:[%s165 + $0x40] sm:$0xf]
      %v758 = vld [vmem:[%s165 + $0x44] sm:$0xf]
      %v759 = vld [vmem:[%s165 + $0x48] sm:$0xf]
      %v760 = vld [vmem:[%s165 + $0x4c] sm:$0xf]
      %v761 = vld [vmem:[%s165 + $0x50] sm:$0xf]
      %v762 = vld [vmem:[%s165 + $0x54] sm:$0xf]
      %v763 = vld [vmem:[%s165 + $0x58] sm:$0xf]
      %v764 = vld [vmem:[%s165 + $0x5c] sm:$0xf]
      %v765 = vld [vmem:[%s165 + $0x60] sm:$0xf]
      %v766 = vld [vmem:[%s165 + $0x64] sm:$0xf]
      %v767 = vld [vmem:[%s165 + $0x68] sm:$0xf]
      %v768 = vld [vmem:[%s165 + $0x6c] sm:$0xf]
      %v769 = vld [vmem:[%s165 + $0x70] sm:$0xf]
      %v770 = vld [vmem:[%s165 + $0x74] sm:$0xf]
      %v771 = vld [vmem:[%s165 + $0x78] sm:$0xf]
      %v772 = vld [vmem:[%s165 + $0x7c] sm:$0xf]
      %v773 = vld [vmem:[%s165 + $0x80] sm:$0xf]
      %v774 = vld [vmem:[%s165 + $0x84] sm:$0xf]
      %v775 = vld [vmem:[%s165 + $0x88] sm:$0xf]
      %v776 = vld [vmem:[%s165 + $0x8c] sm:$0xf]
      %v777 = vld [vmem:[%s165 + $0x90] sm:$0x1]
      %s778 = scalar_lea.vmem %s1, 32
      %v779 = vld [vmem:[%s778] sm:$0xf]
      %v780 = vld [vmem:[%s778 + $0x4] sm:$0xf]
      %v781 = vld [vmem:[%s778 + $0x8] sm:$0xf]
      %v782 = vld [vmem:[%s778 + $0xc] sm:$0xf]
      %v818 = vunpack.c.l.b16 %v743
      %v819 = vunpack.c.l.b16 %v744
      %v820 = vunpack.c.l.b16 %v745
      %v821 = vunpack.c.l.b16 %v746
      %v822 = vunpack.c.l.b16 %v747
      %v823 = vunpack.c.l.b16 %v748
      %v824 = vunpack.c.l.b16 %v749
      %v825 = vunpack.c.l.b16 %v750
      %v826 = vunpack.c.l.b16 %v751
      %v827 = vunpack.c.l.b16 %v752
      %v828 = vunpack.c.l.b16 %v753
      %v829 = vunpack.c.l.b16 %v754
      %v830 = vunpack.c.l.b16 %v755
      %v831 = vunpack.c.l.b16 %v756
      %v832 = vunpack.c.l.b16 %v757
      %v833 = vunpack.c.l.b16 %v758
      %v834 = vunpack.c.l.b16 %v759
      %v835 = vunpack.c.l.b16 %v760
      %v836 = vunpack.c.l.b16 %v761
      %v837 = vunpack.c.l.b16 %v762
      %v838 = vunpack.c.l.b16 %v763
      %v839 = vunpack.c.l.b16 %v764
      %v840 = vunpack.c.l.b16 %v765
      %v841 = vunpack.c.l.b16 %v766
      %v842 = vunpack.c.l.b16 %v767
      %v843 = vunpack.c.l.b16 %v768
      %v844 = vunpack.c.l.b16 %v769
      %v845 = vunpack.c.l.b16 %v770
      %v846 = vunpack.c.l.b16 %v771
      %v847 = vunpack.c.l.b16 %v772
      %v848 = vunpack.c.l.b16 %v773
      %v849 = vunpack.c.l.b16 %v774
      %v850 = vunpack.c.l.b16 %v775
      %v851 = vunpack.c.l.b16 %v776
      %v852 = vunpack.c.l.b16 %v777
      %v853 = vpack.c.b16 %v819, %v818
      %v854 = vpack.c.b16 %v821, %v820
      %v855 = vpack.c.b16 %v823, %v822
      %v856 = vpack.c.b16 %v825, %v824
      %v857 = vpack.c.b16 %v827, %v826
      %v858 = vpack.c.b16 %v829, %v828
      %v859 = vpack.c.b16 %v831, %v830
      %v860 = vpack.c.b16 %v833, %v832
      %v861 = vpack.c.b16 %v835, %v834
      %v862 = vpack.c.b16 %v837, %v836
      %v863 = vpack.c.b16 %v839, %v838
      %v864 = vpack.c.b16 %v841, %v840
      %v865 = vpack.c.b16 %v843, %v842
      %v866 = vpack.c.b16 %v845, %v844
      %v867 = vpack.c.b16 %v847, %v846
      %v868 = vpack.c.b16 %v849, %v848
      %v869 = vpack.c.b16 %v851, %v850
      %v870 = vpack.c.b16 %v852, %v852
      %v872 = vshrl.u32 %v853, 16
      %v874 = vshll.u32 %v853, 16
      %v876 = vrot.slane %v874, 1
      %v877 = vor.u32 %v872, %v876
      %v879 = vshll.u32 %v854, 16
      %v881 = vrot.slane %v879, 1
      %v882 = vsel %vm304, %v877, %v881
      %v883 = vshrl.u32 %v854, 16
      %v885 = vor.u32 %v883, %v881
      %v887 = vshll.u32 %v855, 16
      %v889 = vrot.slane %v887, 1
      %v890 = vsel %vm304, %v885, %v889
      %v891 = vshrl.u32 %v855, 16
      %v893 = vor.u32 %v891, %v889
      %v895 = vshll.u32 %v856, 16
      %v897 = vrot.slane %v895, 1
      %v898 = vsel %vm304, %v893, %v897
      %v899 = vshrl.u32 %v856, 16
      %v901 = vor.u32 %v899, %v897
      %v903 = vshll.u32 %v857, 16
      %v905 = vrot.slane %v903, 1
      %v906 = vsel %vm304, %v901, %v905
      %v907 = vshrl.u32 %v857, 16
      %v909 = vor.u32 %v907, %v905
      %v911 = vshll.u32 %v858, 16
      %v913 = vrot.slane %v911, 1
      %v914 = vsel %vm304, %v909, %v913
      %v915 = vshrl.u32 %v858, 16
      %v917 = vor.u32 %v915, %v913
      %v919 = vshll.u32 %v859, 16
      %v921 = vrot.slane %v919, 1
      %v922 = vsel %vm304, %v917, %v921
      %v923 = vshrl.u32 %v859, 16
      %v925 = vor.u32 %v923, %v921
      %v927 = vshll.u32 %v860, 16
      %v929 = vrot.slane %v927, 1
      %v930 = vsel %vm304, %v925, %v929
      %v931 = vshrl.u32 %v860, 16
      %v933 = vor.u32 %v931, %v929
      %v935 = vshll.u32 %v861, 16
      %v937 = vrot.slane %v935, 1
      %v938 = vsel %vm304, %v933, %v937
      %v939 = vshrl.u32 %v861, 16
      %v941 = vor.u32 %v939, %v937
      %v943 = vshll.u32 %v862, 16
      %v945 = vrot.slane %v943, 1
      %v946 = vsel %vm304, %v941, %v945
      %v947 = vshrl.u32 %v862, 16
      %v949 = vor.u32 %v947, %v945
      %v951 = vshll.u32 %v863, 16
      %v953 = vrot.slane %v951, 1
      %v954 = vsel %vm304, %v949, %v953
      %v955 = vshrl.u32 %v863, 16
      %v957 = vor.u32 %v955, %v953
      %v959 = vshll.u32 %v864, 16
      %v961 = vrot.slane %v959, 1
      %v962 = vsel %vm304, %v957, %v961
      %v963 = vshrl.u32 %v864, 16
      %v965 = vor.u32 %v963, %v961
      %v967 = vshll.u32 %v865, 16
      %v969 = vrot.slane %v967, 1
      %v970 = vsel %vm304, %v965, %v969
      %v971 = vshrl.u32 %v865, 16
      %v973 = vor.u32 %v971, %v969
      %v975 = vshll.u32 %v866, 16
      %v977 = vrot.slane %v975, 1
      %v978 = vsel %vm304, %v973, %v977
      %v979 = vshrl.u32 %v866, 16
      %v981 = vor.u32 %v979, %v977
      %v983 = vshll.u32 %v867, 16
      %v985 = vrot.slane %v983, 1
      %v986 = vsel %vm304, %v981, %v985
      %v987 = vshrl.u32 %v867, 16
      %v989 = vor.u32 %v987, %v985
      %v991 = vshll.u32 %v868, 16
      %v993 = vrot.slane %v991, 1
      %v994 = vsel %vm304, %v989, %v993
      %v995 = vshrl.u32 %v868, 16
      %v997 = vor.u32 %v995, %v993
      %v999 = vshll.u32 %v869, 16
      %v1001 = vrot.slane %v999, 1
      %v1002 = vsel %vm304, %v997, %v1001
      %v1003 = vshrl.u32 %v869, 16
      %v1005 = vor.u32 %v1003, %v1001
      %v1007 = vshll.u32 %v870, 16
      %v1009 = vrot.slane %v1007, 1
      %v1010 = vsel %vm304, %v1005, %v1009
      %v1015 = vunpack.c.l.b16 %v779
      %v1016 = vunpack.c.l.b16 %v780
      %v1017 = vunpack.c.l.b16 %v781
      %v1018 = vunpack.c.l.b16 %v782
      %v1019 = vpack.c.b16 %v1016, %v1015
      %v1020 = vpack.c.b16 %v1018, %v1017
      %v1024 = vsel %vm457, %v882, 0
      %v1027 = vsel %vm457, %v890, 0
      %v1030 = vsel %vm457, %v898, 0
      %v1033 = vsel %vm457, %v906, 0
      %v1036 = vsel %vm457, %v914, 0
      %v1039 = vsel %vm457, %v922, 0
      %v1042 = vsel %vm457, %v930, 0
      %v1045 = vsel %vm457, %v938, 0
      %v1048 = vsel %vm457, %v946, 0
      %v1051 = vsel %vm457, %v954, 0
      %v1054 = vsel %vm457, %v962, 0
      %v1057 = vsel %vm457, %v970, 0
      %v1060 = vsel %vm457, %v978, 0
      %v1063 = vsel %vm457, %v986, 0
      %v1066 = vsel %vm457, %v994, 0
      %v1069 = vsel %vm457, %v1002, 0
      %v1072 = vsel %vm457, %v1010, 0
      %1074 = vmatpush.bf16.msra.mxu0 0
      %1075 = vmatpush.bf16.msra.mxu0 0
      %1076 = vmatpush.bf16.msra.mxu0 0
      %1077 = vmatpush.bf16.msra.mxu0 0
      %1078 = vmatpush.bf16.msra.mxu0 0
      %1079 = vmatpush.bf16.msra.mxu0 0
      %1080 = vmatpush.bf16.msra.mxu0 %v1020
      %1081 = vmatpush.bf16.msra.mxu0 %v1019
      %1082 = vmatmul.bf16.gmra.mxu0 %v1024
      %v1083 = vpop.f32.mrf.mxu0
      %v1084 = vadd.f32 0.0, %v1083
      %v1085 = vpop.f32.mrf.mxu0
      %v1086 = vadd.f32 0.0, %v1085
      %1087 = vmatmul.bf16.gmra.mxu0 %v1027
      %v1088 = vpop.f32.mrf.mxu0
      %v1089 = vadd.f32 0.0, %v1088
      %v1090 = vpop.f32.mrf.mxu0
      %v1091 = vadd.f32 0.0, %v1090
      %1092 = vmatmul.bf16.gmra.mxu0 %v1030
      %v1093 = vpop.f32.mrf.mxu0
      %v1094 = vadd.f32 0.0, %v1093
      %v1095 = vpop.f32.mrf.mxu0
      %v1096 = vadd.f32 0.0, %v1095
      %1097 = vmatmul.bf16.gmra.mxu0 %v1033
      %v1098 = vpop.f32.mrf.mxu0
      %v1099 = vadd.f32 0.0, %v1098
      %v1100 = vpop.f32.mrf.mxu0
      %v1101 = vadd.f32 0.0, %v1100
      %1102 = vmatmul.bf16.gmra.mxu0 %v1036
      %v1103 = vpop.f32.mrf.mxu0
      %v1104 = vadd.f32 0.0, %v1103
      %v1105 = vpop.f32.mrf.mxu0
      %v1106 = vadd.f32 0.0, %v1105
      %1107 = vmatmul.bf16.gmra.mxu0 %v1039
      %v1108 = vpop.f32.mrf.mxu0
      %v1109 = vadd.f32 0.0, %v1108
      %v1110 = vpop.f32.mrf.mxu0
      %v1111 = vadd.f32 0.0, %v1110
      %1112 = vmatmul.bf16.gmra.mxu0 %v1042
      %v1113 = vpop.f32.mrf.mxu0
      %v1114 = vadd.f32 0.0, %v1113
      %v1115 = vpop.f32.mrf.mxu0
      %v1116 = vadd.f32 0.0, %v1115
      %1117 = vmatmul.bf16.gmra.mxu0 %v1045
      %v1118 = vpop.f32.mrf.mxu0
      %v1119 = vadd.f32 0.0, %v1118
      %v1120 = vpop.f32.mrf.mxu0
      %v1121 = vadd.f32 0.0, %v1120
      %1122 = vmatmul.bf16.gmra.mxu0 %v1048
      %v1123 = vpop.f32.mrf.mxu0
      %v1124 = vadd.f32 0.0, %v1123
      %v1125 = vpop.f32.mrf.mxu0
      %v1126 = vadd.f32 0.0, %v1125
      %1127 = vmatmul.bf16.gmra.mxu0 %v1051
      %v1128 = vpop.f32.mrf.mxu0
      %v1129 = vadd.f32 0.0, %v1128
      %v1130 = vpop.f32.mrf.mxu0
      %v1131 = vadd.f32 0.0, %v1130
      %1132 = vmatmul.bf16.gmra.mxu0 %v1054
      %v1133 = vpop.f32.mrf.mxu0
      %v1134 = vadd.f32 0.0, %v1133
      %v1135 = vpop.f32.mrf.mxu0
      %v1136 = vadd.f32 0.0, %v1135
      %1137 = vmatmul.bf16.gmra.mxu0 %v1057
      %v1138 = vpop.f32.mrf.mxu0
      %v1139 = vadd.f32 0.0, %v1138
      %v1140 = vpop.f32.mrf.mxu0
      %v1141 = vadd.f32 0.0, %v1140
      %1142 = vmatmul.bf16.gmra.mxu0 %v1060
      %v1143 = vpop.f32.mrf.mxu0
      %v1144 = vadd.f32 0.0, %v1143
      %v1145 = vpop.f32.mrf.mxu0
      %v1146 = vadd.f32 0.0, %v1145
      %1147 = vmatmul.bf16.gmra.mxu0 %v1063
      %v1148 = vpop.f32.mrf.mxu0
      %v1149 = vadd.f32 0.0, %v1148
      %v1150 = vpop.f32.mrf.mxu0
      %v1151 = vadd.f32 0.0, %v1150
      %1152 = vmatmul.bf16.gmra.mxu0 %v1066
      %v1153 = vpop.f32.mrf.mxu0
      %v1154 = vadd.f32 0.0, %v1153
      %v1155 = vpop.f32.mrf.mxu0
      %v1156 = vadd.f32 0.0, %v1155
      %1157 = vmatmul.bf16.gmra.mxu0 %v1069
      %v1158 = vpop.f32.mrf.mxu0
      %v1159 = vadd.f32 0.0, %v1158
      %v1160 = vpop.f32.mrf.mxu0
      %v1161 = vadd.f32 0.0, %v1160
      %1162 = vmatmul.bf16.gmra.mxu0 %v1072
      %v1163 = vpop.f32.mrf.mxu0
      %v1164 = vadd.f32 0.0, %v1163
      %v1165 = vpop.f32.mrf.mxu0
      %v1166 = vadd.f32 0.0, %v1165
      %1167 = vdwg.mxu0
      %v1168 = vadd.f32 %v659, %v1084
      %v1169 = vadd.f32 %v661, %v1086
      %v1170 = vadd.f32 %v664, %v1089
      %v1171 = vadd.f32 %v666, %v1091
      %v1172 = vadd.f32 %v669, %v1094
      %v1173 = vadd.f32 %v671, %v1096
      %v1174 = vadd.f32 %v674, %v1099
      %v1175 = vadd.f32 %v676, %v1101
      %v1176 = vadd.f32 %v679, %v1104
      %v1177 = vadd.f32 %v681, %v1106
      %v1178 = vadd.f32 %v684, %v1109
      %v1179 = vadd.f32 %v686, %v1111
      %v1180 = vadd.f32 %v689, %v1114
      %v1181 = vadd.f32 %v691, %v1116
      %v1182 = vadd.f32 %v694, %v1119
      %v1183 = vadd.f32 %v696, %v1121
      %v1184 = vadd.f32 %v699, %v1124
      %v1185 = vadd.f32 %v701, %v1126
      %v1186 = vadd.f32 %v704, %v1129
      %v1187 = vadd.f32 %v706, %v1131
      %v1188 = vadd.f32 %v709, %v1134
      %v1189 = vadd.f32 %v711, %v1136
      %v1190 = vadd.f32 %v714, %v1139
      %v1191 = vadd.f32 %v716, %v1141
      %v1192 = vadd.f32 %v719, %v1144
      %v1193 = vadd.f32 %v721, %v1146
      %v1194 = vadd.f32 %v724, %v1149
      %v1195 = vadd.f32 %v726, %v1151
      %v1196 = vadd.f32 %v729, %v1154
      %v1197 = vadd.f32 %v731, %v1156
      %v1198 = vadd.f32 %v734, %v1159
      %v1199 = vadd.f32 %v736, %v1161
      %v1200 = vadd.f32 %v739, %v1164
      %v1201 = vadd.f32 %v741, %v1166
      %v1202 = vld [vmem:[%s165 + $0x8] sm:$0xe]
      %s1203 = scalar_lea.vmem %s1, 48
      %v1204 = vld [vmem:[%s1203] sm:$0xf]
      %v1205 = vld [vmem:[%s1203 + $0x4] sm:$0xf]
      %v1206 = vld [vmem:[%s1203 + $0x8] sm:$0xf]
      %v1207 = vld [vmem:[%s1203 + $0xc] sm:$0xf]
      %v1209 = vunpack.c.l.b16 %v1202
      %v1210 = vpack.c.b16 %v819, %v1209
      %vm1211 = vcmask 1046528
      %v1212 = vrot.slane %v1210, 1
      %v1213 = vrot.slane %v854, 1
      %v1214 = vsel %vm1211, %v1212, %v1213
      %v1215 = vrot.slane %v855, 1
      %v1216 = vsel %vm1211, %v1213, %v1215
      %v1217 = vrot.slane %v856, 1
      %v1218 = vsel %vm1211, %v1215, %v1217
      %v1219 = vrot.slane %v857, 1
      %v1220 = vsel %vm1211, %v1217, %v1219
      %v1221 = vrot.slane %v858, 1
      %v1222 = vsel %vm1211, %v1219, %v1221
      %v1223 = vrot.slane %v859, 1
      %v1224 = vsel %vm1211, %v1221, %v1223
      %v1225 = vrot.slane %v860, 1
      %v1226 = vsel %vm1211, %v1223, %v1225
      %v1227 = vrot.slane %v861, 1
      %v1228 = vsel %vm1211, %v1225, %v1227
      %v1229 = vrot.slane %v862, 1
      %v1230 = vsel %vm1211, %v1227, %v1229
      %v1231 = vrot.slane %v863, 1
      %v1232 = vsel %vm1211, %v1229, %v1231
      %v1233 = vrot.slane %v864, 1
      %v1234 = vsel %vm1211, %v1231, %v1233
      %v1235 = vrot.slane %v865, 1
      %v1236 = vsel %vm1211, %v1233, %v1235
      %v1237 = vrot.slane %v866, 1
      %v1238 = vsel %vm1211, %v1235, %v1237
      %v1239 = vrot.slane %v867, 1
      %v1240 = vsel %vm1211, %v1237, %v1239
      %v1241 = vrot.slane %v868, 1
      %v1242 = vsel %vm1211, %v1239, %v1241
      %v1243 = vrot.slane %v869, 1
      %v1244 = vsel %vm1211, %v1241, %v1243
      %v1245 = vrot.slane %v870, 1
      %v1246 = vsel %vm1211, %v1243, %v1245
      %v1251 = vunpack.c.l.b16 %v1204
      %v1252 = vunpack.c.l.b16 %v1205
      %v1253 = vunpack.c.l.b16 %v1206
      %v1254 = vunpack.c.l.b16 %v1207
      %v1255 = vpack.c.b16 %v1252, %v1251
      %v1256 = vpack.c.b16 %v1254, %v1253
      %v1260 = vsel %vm457, %v1214, 0
      %v1263 = vsel %vm457, %v1216, 0
      %v1266 = vsel %vm457, %v1218, 0
      %v1269 = vsel %vm457, %v1220, 0
      %v1272 = vsel %vm457, %v1222, 0
      %v1275 = vsel %vm457, %v1224, 0
      %v1278 = vsel %vm457, %v1226, 0
      %v1281 = vsel %vm457, %v1228, 0
      %v1284 = vsel %vm457, %v1230, 0
      %v1287 = vsel %vm457, %v1232, 0
      %v1290 = vsel %vm457, %v1234, 0
      %v1293 = vsel %vm457, %v1236, 0
      %v1296 = vsel %vm457, %v1238, 0
      %v1299 = vsel %vm457, %v1240, 0
      %v1302 = vsel %vm457, %v1242, 0
      %v1305 = vsel %vm457, %v1244, 0
      %v1308 = vsel %vm457, %v1246, 0
      %1310 = vmatpush.bf16.msra.mxu0 0
      %1311 = vmatpush.bf16.msra.mxu0 0
      %1312 = vmatpush.bf16.msra.mxu0 0
      %1313 = vmatpush.bf16.msra.mxu0 0
      %1314 = vmatpush.bf16.msra.mxu0 0
      %1315 = vmatpush.bf16.msra.mxu0 0
      %1316 = vmatpush.bf16.msra.mxu0 %v1256
      %1317 = vmatpush.bf16.msra.mxu0 %v1255
      %1318 = vmatmul.bf16.gmra.mxu0 %v1260
      %v1319 = vpop.f32.mrf.mxu0
      %v1320 = vadd.f32 0.0, %v1319
      %v1321 = vpop.f32.mrf.mxu0
      %v1322 = vadd.f32 0.0, %v1321
      %1323 = vmatmul.bf16.gmra.mxu0 %v1263
      %v1324 = vpop.f32.mrf.mxu0
      %v1325 = vadd.f32 0.0, %v1324
      %v1326 = vpop.f32.mrf.mxu0
      %v1327 = vadd.f32 0.0, %v1326
      %1328 = vmatmul.bf16.gmra.mxu0 %v1266
      %v1329 = vpop.f32.mrf.mxu0
      %v1330 = vadd.f32 0.0, %v1329
      %v1331 = vpop.f32.mrf.mxu0
      %v1332 = vadd.f32 0.0, %v1331
      %1333 = vmatmul.bf16.gmra.mxu0 %v1269
      %v1334 = vpop.f32.mrf.mxu0
      %v1335 = vadd.f32 0.0, %v1334
      %v1336 = vpop.f32.mrf.mxu0
      %v1337 = vadd.f32 0.0, %v1336
      %1338 = vmatmul.bf16.gmra.mxu0 %v1272
      %v1339 = vpop.f32.mrf.mxu0
      %v1340 = vadd.f32 0.0, %v1339
      %v1341 = vpop.f32.mrf.mxu0
      %v1342 = vadd.f32 0.0, %v1341
      %1343 = vmatmul.bf16.gmra.mxu0 %v1275
      %v1344 = vpop.f32.mrf.mxu0
      %v1345 = vadd.f32 0.0, %v1344
      %v1346 = vpop.f32.mrf.mxu0
      %v1347 = vadd.f32 0.0, %v1346
      %1348 = vmatmul.bf16.gmra.mxu0 %v1278
      %v1349 = vpop.f32.mrf.mxu0
      %v1350 = vadd.f32 0.0, %v1349
      %v1351 = vpop.f32.mrf.mxu0
      %v1352 = vadd.f32 0.0, %v1351
      %1353 = vmatmul.bf16.gmra.mxu0 %v1281
      %v1354 = vpop.f32.mrf.mxu0
      %v1355 = vadd.f32 0.0, %v1354
      %v1356 = vpop.f32.mrf.mxu0
      %v1357 = vadd.f32 0.0, %v1356
      %1358 = vmatmul.bf16.gmra.mxu0 %v1284
      %v1359 = vpop.f32.mrf.mxu0
      %v1360 = vadd.f32 0.0, %v1359
      %v1361 = vpop.f32.mrf.mxu0
      %v1362 = vadd.f32 0.0, %v1361
      %1363 = vmatmul.bf16.gmra.mxu0 %v1287
      %v1364 = vpop.f32.mrf.mxu0
      %v1365 = vadd.f32 0.0, %v1364
      %v1366 = vpop.f32.mrf.mxu0
      %v1367 = vadd.f32 0.0, %v1366
      %1368 = vmatmul.bf16.gmra.mxu0 %v1290
      %v1369 = vpop.f32.mrf.mxu0
      %v1370 = vadd.f32 0.0, %v1369
      %v1371 = vpop.f32.mrf.mxu0
      %v1372 = vadd.f32 0.0, %v1371
      %1373 = vmatmul.bf16.gmra.mxu0 %v1293
      %v1374 = vpop.f32.mrf.mxu0
      %v1375 = vadd.f32 0.0, %v1374
      %v1376 = vpop.f32.mrf.mxu0
      %v1377 = vadd.f32 0.0, %v1376
      %1378 = vmatmul.bf16.gmra.mxu0 %v1296
      %v1379 = vpop.f32.mrf.mxu0
      %v1380 = vadd.f32 0.0, %v1379
      %v1381 = vpop.f32.mrf.mxu0
      %v1382 = vadd.f32 0.0, %v1381
      %1383 = vmatmul.bf16.gmra.mxu0 %v1299
      %v1384 = vpop.f32.mrf.mxu0
      %v1385 = vadd.f32 0.0, %v1384
      %v1386 = vpop.f32.mrf.mxu0
      %v1387 = vadd.f32 0.0, %v1386
      %1388 = vmatmul.bf16.gmra.mxu0 %v1302
      %v1389 = vpop.f32.mrf.mxu0
      %v1390 = vadd.f32 0.0, %v1389
      %v1391 = vpop.f32.mrf.mxu0
      %v1392 = vadd.f32 0.0, %v1391
      %1393 = vmatmul.bf16.gmra.mxu0 %v1305
      %v1394 = vpop.f32.mrf.mxu0
      %v1395 = vadd.f32 0.0, %v1394
      %v1396 = vpop.f32.mrf.mxu0
      %v1397 = vadd.f32 0.0, %v1396
      %1398 = vmatmul.bf16.gmra.mxu0 %v1308
      %v1399 = vpop.f32.mrf.mxu0
      %v1400 = vadd.f32 0.0, %v1399
      %v1401 = vpop.f32.mrf.mxu0
      %v1402 = vadd.f32 0.0, %v1401
      %1403 = vdwg.mxu0
      %v1404 = vadd.f32 %v1168, %v1320
      %v1405 = vadd.f32 %v1169, %v1322
      %v1406 = vadd.f32 %v1170, %v1325
      %v1407 = vadd.f32 %v1171, %v1327
      %v1408 = vadd.f32 %v1172, %v1330
      %v1409 = vadd.f32 %v1173, %v1332
      %v1410 = vadd.f32 %v1174, %v1335
      %v1411 = vadd.f32 %v1175, %v1337
      %v1412 = vadd.f32 %v1176, %v1340
      %v1413 = vadd.f32 %v1177, %v1342
      %v1414 = vadd.f32 %v1178, %v1345
      %v1415 = vadd.f32 %v1179, %v1347
      %v1416 = vadd.f32 %v1180, %v1350
      %v1417 = vadd.f32 %v1181, %v1352
      %v1418 = vadd.f32 %v1182, %v1355
      %v1419 = vadd.f32 %v1183, %v1357
      %v1420 = vadd.f32 %v1184, %v1360
      %v1421 = vadd.f32 %v1185, %v1362
      %v1422 = vadd.f32 %v1186, %v1365
      %v1423 = vadd.f32 %v1187, %v1367
      %v1424 = vadd.f32 %v1188, %v1370
      %v1425 = vadd.f32 %v1189, %v1372
      %v1426 = vadd.f32 %v1190, %v1375
      %v1427 = vadd.f32 %v1191, %v1377
      %v1428 = vadd.f32 %v1192, %v1380
      %v1429 = vadd.f32 %v1193, %v1382
      %v1430 = vadd.f32 %v1194, %v1385
      %v1431 = vadd.f32 %v1195, %v1387
      %v1432 = vadd.f32 %v1196, %v1390
      %v1433 = vadd.f32 %v1197, %v1392
      %v1434 = vadd.f32 %v1198, %v1395
      %v1435 = vadd.f32 %v1199, %v1397
      %v1436 = vadd.f32 %v1200, %v1400
      %v1437 = vadd.f32 %v1201, %v1402
      %v1438 = vld [vmem:[%s2] sm:$0x1]
      %v1440 = vperm.slane %v1438, 0
      %v1442 = vadd.f32 %v1404, %v1440
      %v1443 = vadd.f32 %v1405, %v1440
      %v1444 = vadd.f32 %v1406, %v1440
      %v1445 = vadd.f32 %v1407, %v1440
      %v1446 = vadd.f32 %v1408, %v1440
      %v1447 = vadd.f32 %v1409, %v1440
      %v1448 = vadd.f32 %v1410, %v1440
      %v1449 = vadd.f32 %v1411, %v1440
      %v1450 = vadd.f32 %v1412, %v1440
      %v1451 = vadd.f32 %v1413, %v1440
      %v1452 = vadd.f32 %v1414, %v1440
      %v1453 = vadd.f32 %v1415, %v1440
      %v1454 = vadd.f32 %v1416, %v1440
      %v1455 = vadd.f32 %v1417, %v1440
      %v1456 = vadd.f32 %v1418, %v1440
      %v1457 = vadd.f32 %v1419, %v1440
      %v1458 = vadd.f32 %v1420, %v1440
      %v1459 = vadd.f32 %v1421, %v1440
      %v1460 = vadd.f32 %v1422, %v1440
      %v1461 = vadd.f32 %v1423, %v1440
      %v1462 = vadd.f32 %v1424, %v1440
      %v1463 = vadd.f32 %v1425, %v1440
      %v1464 = vadd.f32 %v1426, %v1440
      %v1465 = vadd.f32 %v1427, %v1440
      %v1466 = vadd.f32 %v1428, %v1440
      %v1467 = vadd.f32 %v1429, %v1440
      %v1468 = vadd.f32 %v1430, %v1440
      %v1469 = vadd.f32 %v1431, %v1440
      %v1470 = vadd.f32 %v1432, %v1440
      %v1471 = vadd.f32 %v1433, %v1440
      %v1472 = vadd.f32 %v1434, %v1440
      %v1473 = vadd.f32 %v1435, %v1440
      %v1474 = vadd.f32 %v1436, %v1440
      %v1475 = vadd.f32 %v1437, %v1440
      %v1476 = vmax.f32 %v1442, 0.0
      %v1477 = vmax.f32 %v1443, 0.0
      %v1478 = vmax.f32 %v1444, 0.0
      %v1479 = vmax.f32 %v1445, 0.0
      %v1480 = vmax.f32 %v1446, 0.0
      %v1481 = vmax.f32 %v1447, 0.0
      %v1482 = vmax.f32 %v1448, 0.0
      %v1483 = vmax.f32 %v1449, 0.0
      %v1484 = vmax.f32 %v1450, 0.0
      %v1485 = vmax.f32 %v1451, 0.0
      %v1486 = vmax.f32 %v1452, 0.0
      %v1487 = vmax.f32 %v1453, 0.0
      %v1488 = vmax.f32 %v1454, 0.0
      %v1489 = vmax.f32 %v1455, 0.0
      %v1490 = vmax.f32 %v1456, 0.0
      %v1491 = vmax.f32 %v1457, 0.0
      %v1492 = vmax.f32 %v1458, 0.0
      %v1493 = vmax.f32 %v1459, 0.0
      %v1494 = vmax.f32 %v1460, 0.0
      %v1495 = vmax.f32 %v1461, 0.0
      %v1496 = vmax.f32 %v1462, 0.0
      %v1497 = vmax.f32 %v1463, 0.0
      %v1498 = vmax.f32 %v1464, 0.0
      %v1499 = vmax.f32 %v1465, 0.0
      %v1500 = vmax.f32 %v1466, 0.0
      %v1501 = vmax.f32 %v1467, 0.0
      %v1502 = vmax.f32 %v1468, 0.0
      %v1503 = vmax.f32 %v1469, 0.0
      %v1504 = vmax.f32 %v1470, 0.0
      %v1505 = vmax.f32 %v1471, 0.0
      %v1506 = vmax.f32 %v1472, 0.0
      %v1507 = vmax.f32 %v1473, 0.0
      %v1508 = vmax.f32 %v1474, 0.0
      %v1509 = vmax.f32 %v1475, 0.0
      %v1510 = vpack.c.bf16 %v1476, %v1476
      %v1511 = vpack.c.bf16 %v1477, %v1477
      %v1512 = vpack.c.bf16 %v1478, %v1478
      %v1513 = vpack.c.bf16 %v1479, %v1479
      %v1514 = vpack.c.bf16 %v1480, %v1480
      %v1515 = vpack.c.bf16 %v1481, %v1481
      %v1516 = vpack.c.bf16 %v1482, %v1482
      %v1517 = vpack.c.bf16 %v1483, %v1483
      %v1518 = vpack.c.bf16 %v1484, %v1484
      %v1519 = vpack.c.bf16 %v1485, %v1485
      %v1520 = vpack.c.bf16 %v1486, %v1486
      %v1521 = vpack.c.bf16 %v1487, %v1487
      %v1522 = vpack.c.bf16 %v1488, %v1488
      %v1523 = vpack.c.bf16 %v1489, %v1489
      %v1524 = vpack.c.bf16 %v1490, %v1490
      %v1525 = vpack.c.bf16 %v1491, %v1491
      %v1526 = vpack.c.bf16 %v1492, %v1492
      %v1527 = vpack.c.bf16 %v1493, %v1493
      %v1528 = vpack.c.bf16 %v1494, %v1494
      %v1529 = vpack.c.bf16 %v1495, %v1495
      %v1530 = vpack.c.bf16 %v1496, %v1496
      %v1531 = vpack.c.bf16 %v1497, %v1497
      %v1532 = vpack.c.bf16 %v1498, %v1498
      %v1533 = vpack.c.bf16 %v1499, %v1499
      %v1534 = vpack.c.bf16 %v1500, %v1500
      %v1535 = vpack.c.bf16 %v1501, %v1501
      %v1536 = vpack.c.bf16 %v1502, %v1502
      %v1537 = vpack.c.bf16 %v1503, %v1503
      %v1538 = vpack.c.bf16 %v1504, %v1504
      %v1539 = vpack.c.bf16 %v1505, %v1505
      %v1540 = vpack.c.bf16 %v1506, %v1506
      %v1541 = vpack.c.bf16 %v1507, %v1507
      %v1542 = vpack.c.bf16 %v1508, %v1508
      %v1543 = vpack.c.bf16 %v1509, %v1509
      %1544 = vst [vmem:[%s170] sm:$0xf] %v1510
      %1545 = vst [vmem:[%s170 + $0x4] sm:$0xf] %v1511
      %1546 = vst [vmem:[%s170 + $0x8] sm:$0xf] %v1512
      %1547 = vst [vmem:[%s170 + $0xc] sm:$0xf] %v1513
      %1548 = vst [vmem:[%s170 + $0x10] sm:$0xf] %v1514
      %1549 = vst [vmem:[%s170 + $0x14] sm:$0xf] %v1515
      %1550 = vst [vmem:[%s170 + $0x18] sm:$0xf] %v1516
      %1551 = vst [vmem:[%s170 + $0x1c] sm:$0xf] %v1517
      %1552 = vst [vmem:[%s170 + $0x20] sm:$0xf] %v1518
      %1553 = vst [vmem:[%s170 + $0x24] sm:$0xf] %v1519
      %1554 = vst [vmem:[%s170 + $0x28] sm:$0xf] %v1520
      %1555 = vst [vmem:[%s170 + $0x2c] sm:$0xf] %v1521
      %1556 = vst [vmem:[%s170 + $0x30] sm:$0xf] %v1522
      %1557 = vst [vmem:[%s170 + $0x34] sm:$0xf] %v1523
      %1558 = vst [vmem:[%s170 + $0x38] sm:$0xf] %v1524
      %1559 = vst [vmem:[%s170 + $0x3c] sm:$0xf] %v1525
      %1560 = vst [vmem:[%s170 + $0x40] sm:$0xf] %v1526
      %1561 = vst [vmem:[%s170 + $0x44] sm:$0xf] %v1527
      %1562 = vst [vmem:[%s170 + $0x48] sm:$0xf] %v1528
      %1563 = vst [vmem:[%s170 + $0x4c] sm:$0xf] %v1529
      %1564 = vst [vmem:[%s170 + $0x50] sm:$0xf] %v1530
      %1565 = vst [vmem:[%s170 + $0x54] sm:$0xf] %v1531
      %1566 = vst [vmem:[%s170 + $0x58] sm:$0xf] %v1532
      %1567 = vst [vmem:[%s170 + $0x5c] sm:$0xf] %v1533
      %1568 = vst [vmem:[%s170 + $0x60] sm:$0xf] %v1534
      %1569 = vst [vmem:[%s170 + $0x64] sm:$0xf] %v1535
      %1570 = vst [vmem:[%s170 + $0x68] sm:$0xf] %v1536
      %1571 = vst [vmem:[%s170 + $0x6c] sm:$0xf] %v1537
      %1572 = vst [vmem:[%s170 + $0x70] sm:$0xf] %v1538
      %1573 = vst [vmem:[%s170 + $0x74] sm:$0xf] %v1539
      %1574 = vst [vmem:[%s170 + $0x78] sm:$0xf] %v1540
      %1575 = vst [vmem:[%s170 + $0x7c] sm:$0xf] %v1541
      %1576 = vst [vmem:[%s170 + $0x80] sm:$0xf] %v1542
      %1577 = vst [vmem:[%s170 + $0x84] sm:$0xf] %v1543
      %p1578 = scmp.lt.s32.totalorder %s14, 1
      %s1579 = scalar_select %p1578, %s14, 1
      %s1580 = smul.addr %s1579, 34
      %s1581 = smul.addr %s1580, 4
      %s1582 = scalar_lea.vmem %s3, %s1581
      // Predicated region
      $region33: #{general_net_forward_clf.2} parent=31 // pred_check
        %p1583 = pneg %p100
      $region34: #{general_net_forward_clf.2} parent=31 // pred_check_branch
        %1585 = sbr.rel (%p1583) target = $region36
      $region35: #{general_net_forward_clf.2} parent=31 // pred_region
        _
      $region36: #{general_net_forward_clf.2} parent=31 // pred_fallthru
        _
    $region32: #{general_net_forward_clf.2} parent=5 // pred_fallthru
      _
    %p1586 = scmp.le.s32.totalorder 2, %s9
    // Predicated region
    $region37: #{general_net_forward_clf.2} parent=5 // pred_check
      %p1587 = pneg %p1586
    $region38: #{general_net_forward_clf.2} parent=5 // pred_check_branch
      %1589 = sbr.rel (%p1587) target = $region40
    $region39: #{general_net_forward_clf.2} parent=5 // pred_region
      %s1590 = ssub.s32 %s9, 2
      // Predicated region
      $region41: #{general_net_forward_clf.2} parent=39 // pred_check
        %p1591 = pneg %p106
      $region42: #{general_net_forward_clf.2} parent=39 // pred_check_branch
        %1593 = sbr.rel (%p1591) target = $region44
      $region43: #{general_net_forward_clf.2} parent=39 // pred_region
        %p1594 = scmp.lt.s32.totalorder %s15, 1
        %s1595 = scalar_select %p1594, %s15, 1
        %s1596 = smul.addr %s1595, 34
        %s1597 = smul.addr %s1596, 4
        %s1598 = scalar_lea.vmem %s3, %s1597
      $region44: #{general_net_forward_clf.2} parent=39 // pred_fallthru
        _
    $region40: #{general_net_forward_clf.2} parent=5 // pred_fallthru
      _
  $region6: #{general_net_forward_clf.2} parent=0 // loop_footer
    %s13 = sadd.s32 1, %s9
  $region7: #{general_net_forward_clf.2} parent=0 // loop_footer_branch
    %8 = sbr.rel target = $region3
  $region8: #{general_net_forward_clf.2} parent=0 // loop_exit
    _

// kernel: tile.8
$region0: #{tile.8}
  #allocation0 [shape = 's32[1]{0}', space=sflag, size = 0x4, scoped, tag = 'scoped memory for tile.8']
  %s0 = inlined_call_operand.vmem [shape: f32[9], index: 0, kind: input, shape index: {}]
  %s1 = inlined_call_operand.vmem [shape: f32[8,9], index: 1, kind: output, shape index: {}]
  // Predicated region
  $region2: #{tile.8} parent=0 // pred_check
    _
  $region3: #{tile.8} parent=0 // pred_check_branch
    %3 = sbr.rel (0) target = $region5
  $region4: #{tile.8} parent=0 // pred_region
    _
  $region5: #{tile.8} parent=0 // pred_fallthru
    _
  %v4 = vld [vmem:[%s0] ss:$0 sm:$0xff]
  %5 = vst [vmem:[%s1] sm:$0xff] %v4

// kernel: tile.0
$region0: #{tile.0}
  %s0 = inlined_call_operand.vmem [shape: f32[8,9], index: 0, kind: input, shape index: {}]
  %s1 = inlined_call_operand.vmem [shape: f32[72,1], index: 1, kind: output, shape index: {}]
  %v2 = vld [vmem:[%s0] sm:$0xff]
  %vm3 = vcmask 7168
  %4 = vst.msk [vmem:[%s1] ss:$9 sm:$0xff] %vm3, %v2
  %v5 = vld.sshfl [vmem:[%s0] sm:$0xff pattern:$0x36251407]
  %6 = vrot.lane.b32.xlu0 %v5, 127
  %v7 = vpop.permute.xlu0 %6
  %vm8 = vcmask 7168
  %s9 = scalar_lea.vmem %s1, 64
  %10 = vst.msk [vmem:[%s9] ss:$-63 sm:$0x3] %vm8, %v7
  %s11 = scalar_lea.vmem %s1, 91
  %12 = vst.msk [vmem:[%s11] ss:$-27 sm:$0xc] %vm8, %v7
  %s13 = scalar_lea.vmem %s1, 154
  %14 = vst.msk [vmem:[%s13] ss:$-27 sm:$0x30] %vm8, %v7
  %s15 = scalar_lea.vmem %s1, 217
  %16 = vst.msk [vmem:[%s15] ss:$-27 sm:$0xc0] %vm8, %v7
  %v17 = vld.sshfl [vmem:[%s0] sm:$0xff pattern:$0x36251407]
  %18 = vrot.lane.b32.xlu0 %v17, 126
  %v19 = vpop.permute.xlu0 %18
  %vm20 = vcmask 7168
  %s21 = scalar_lea.vmem %s1, 65
  %22 = vst.msk [vmem:[%s21] ss:$-63 sm:$0x3] %vm20, %v19
  %s23 = scalar_lea.vmem %s1, 92
  %24 = vst.msk [vmem:[%s23] ss:$-27 sm:$0xc] %vm20, %v19
  %s25 = scalar_lea.vmem %s1, 155
  %26 = vst.msk [vmem:[%s25] ss:$-27 sm:$0x30] %vm20, %v19
  %s27 = scalar_lea.vmem %s1, 218
  %28 = vst.msk [vmem:[%s27] ss:$-27 sm:$0xc0] %vm20, %v19
  %v29 = vld.sshfl [vmem:[%s0] sm:$0xff pattern:$0x36251407]
  %30 = vrot.lane.b32.xlu0 %v29, 125
  %v31 = vpop.permute.xlu0 %30
  %vm32 = vcmask 7168
  %s33 = scalar_lea.vmem %s1, 66
  %34 = vst.msk [vmem:[%s33] ss:$-63 sm:$0x3] %vm32, %v31
  %s35 = scalar_lea.vmem %s1, 93
  %36 = vst.msk [vmem:[%s35] ss:$-27 sm:$0xc] %vm32, %v31
  %s37 = scalar_lea.vmem %s1, 156
  %38 = vst.msk [vmem:[%s37] ss:$-27 sm:$0x30] %vm32, %v31
  %s39 = scalar_lea.vmem %s1, 219
  %40 = vst.msk [vmem:[%s39] ss:$-27 sm:$0xc0] %vm32, %v31
  %v41 = vld.sshfl [vmem:[%s0] sm:$0xff pattern:$0x36251407]
  %42 = vrot.lane.b32.xlu0 %v41, 124
  %v43 = vpop.permute.xlu0 %42
  %vm44 = vcmask 7168
  %s45 = scalar_lea.vmem %s1, 67
  %46 = vst.msk [vmem:[%s45] ss:$-63 sm:$0x3] %vm44, %v43
  %s47 = scalar_lea.vmem %s1, 94
  %48 = vst.msk [vmem:[%s47] ss:$-27 sm:$0xc] %vm44, %v43
  %s49 = scalar_lea.vmem %s1, 157
  %50 = vst.msk [vmem:[%s49] ss:$-27 sm:$0x30] %vm44, %v43
  %s51 = scalar_lea.vmem %s1, 220
  %52 = vst.msk [vmem:[%s51] ss:$-27 sm:$0xc0] %vm44, %v43
  %v53 = vld.sshfl [vmem:[%s0] sm:$0xff pattern:$0x62514073]
  %54 = vrot.lane.b32.xlu0 %v53, 123
  %v55 = vpop.permute.xlu0 %54
  %vm56 = vcmask 7168
  %s57 = scalar_lea.vmem %s1, 32
  %58 = vst.msk [vmem:[%s57] ss:$36 sm:$0x3] %vm56, %v55
  %s59 = scalar_lea.vmem %s1, 4294967229
  %60 = vst.msk [vmem:[%s59] ss:$36 sm:$0xc] %vm56, %v55
  %s61 = scalar_lea.vmem %s1, 4294967166
  %62 = vst.msk [vmem:[%s61] ss:$36 sm:$0x30] %vm56, %v55
  %s63 = scalar_lea.vmem %s1, 4294967103
  %64 = vst.msk [vmem:[%s63] ss:$36 sm:$0xc0] %vm56, %v55
  %v65 = vld.sshfl [vmem:[%s0] sm:$0xff pattern:$0x62514073]
  %66 = vrot.lane.b32.xlu0 %v65, 122
  %v67 = vpop.permute.xlu0 %66
  %vm68 = vcmask 7168
  %s69 = scalar_lea.vmem %s1, 33
  %70 = vst.msk [vmem:[%s69] ss:$36 sm:$0x3] %vm68, %v67
  %s71 = scalar_lea.vmem %s1, 4294967230
  %72 = vst.msk [vmem:[%s71] ss:$36 sm:$0xc] %vm68, %v67
  %s73 = scalar_lea.vmem %s1, 4294967167
  %74 = vst.msk [vmem:[%s73] ss:$36 sm:$0x30] %vm68, %v67
  %s75 = scalar_lea.vmem %s1, 4294967104
  %76 = vst.msk [vmem:[%s75] ss:$36 sm:$0xc0] %vm68, %v67
  %v77 = vld.sshfl [vmem:[%s0] sm:$0xff pattern:$0x62514073]
  %78 = vrot.lane.b32.xlu0 %v77, 121
  %v79 = vpop.permute.xlu0 %78
  %vm80 = vcmask 7168
  %s81 = scalar_lea.vmem %s1, 34
  %82 = vst.msk [vmem:[%s81] ss:$36 sm:$0x3] %vm80, %v79
  %s83 = scalar_lea.vmem %s1, 4294967231
  %84 = vst.msk [vmem:[%s83] ss:$36 sm:$0xc] %vm80, %v79
  %s85 = scalar_lea.vmem %s1, 4294967168
  %86 = vst.msk [vmem:[%s85] ss:$36 sm:$0x30] %vm80, %v79
  %s87 = scalar_lea.vmem %s1, 4294967105
  %88 = vst.msk [vmem:[%s87] ss:$36 sm:$0xc0] %vm80, %v79
  %v89 = vld.sshfl [vmem:[%s0] sm:$0xff pattern:$0x62514073]
  %90 = vrot.lane.b32.xlu0 %v89, 120
  %v91 = vpop.permute.xlu0 %90
  %vm92 = vcmask 7168
  %s93 = scalar_lea.vmem %s1, 35
  %94 = vst.msk [vmem:[%s93] ss:$36 sm:$0x3] %vm92, %v91
  %s95 = scalar_lea.vmem %s1, 4294967232
  %96 = vst.msk [vmem:[%s95] ss:$36 sm:$0xc] %vm92, %v91
  %s97 = scalar_lea.vmem %s1, 4294967169
  %98 = vst.msk [vmem:[%s97] ss:$36 sm:$0x30] %vm92, %v91
  %s99 = scalar_lea.vmem %s1, 4294967106
  %100 = vst.msk [vmem:[%s99] ss:$36 sm:$0xc0] %vm92, %v91

// kernel: general_net_forward_clf.3
$region0: #{general_net_forward_clf.3}
  #allocation0 [shape = 'u32[]', space=smem, size = 0x4, offset = 0x4, fixed_abs, tag = 'smem constant byte address 0x4 - core index']
  #allocation1 [shape = 'u32[72,128]{1,0:T(1,128)}', space=vmem, size = 0x9000, scoped, tag = 'internal scratch']
  %s0 = inlined_call_operand.vmem [shape: bf16[2,88,64], index: 0, kind: input, shape index: {}]
  %s1 = inlined_call_operand.vmem [shape: bf16[4,64,128], index: 1, kind: input, shape index: {}]
  %s2 = inlined_call_operand.vmem [shape: f32[1,128], index: 2, kind: input, shape index: {}]
  %s3 = inlined_call_operand.vmem [shape: f32[72,1], index: 3, kind: input, shape index: {}]
  %s4 = inlined_call_operand.vmem [shape: f32[128,128], index: 4, kind: input, shape index: {}]
  %s5 = inlined_call_operand.vmem [shape: f32[1,128], index: 5, kind: input, shape index: {}]
  %s6 = inlined_call_operand.hbm [shape: f32[2,1,128], index: 6, kind: output, shape index: {}]
  %s7 = sld [smem:[#allocation0]]
  $region57: #{general_net_forward_clf.3} parent=0
    _
  %s9 = ssub.s32 1, %s7
  %s10 = scalar_select 0, %s9, %s7
  $region1: #{general_net_forward_clf.3} parent=0
    #allocation2 [shape = 'u8[1024]{0}', space=vmem, size = 0x400, scoped, tag = 'output window, operand 0']
    #allocation3 [shape = 's32[2]{0}', space=sflag, size = 0x8, scoped, tag = 'scoped memory for general_net_forward_clf.3']
    %11 = vsyncpa [#allocation3], 0
    %s12 = scalar_lea.sflag [#allocation3], 1
    %13 = vsyncpa %s12, 0
    loop: start=0, step=1, limit=4
    $region2: #{general_net_forward_clf.3} parent=1 // loop_pre_header
      _
    $region3: #{general_net_forward_clf.3} parent=1 // loop_header
      %s15 = sphi 0, %s19
      %p16 = scmp.ge.s32.totalorder %s15, 4
      %s25 = sphi 0, %s27
      %s28 = sphi 0, %s25
      %s29 = sphi 0, %s28
      %s45 = sphi 0, %s29
      %s49 = sphi 0, %s49
      %s51 = sphi 0, %s49
      %s52 = sphi 0, %s51
      %s66 = sphi 0, %s52
      %s70 = sphi 0, %s70
      %s72 = sphi 0, %s70
      %s73 = sphi 0, %s72
      %s87 = sphi 0, %s73
      %s91 = sphi 0, %s91
      %s93 = sphi 0, %s91
      %s94 = sphi 0, %s93
      %s108 = sphi 0, %s94
      %s112 = sphi 0, %s112
      %s114 = sphi 0, %s112
      %s115 = sphi 0, %s114
      %s129 = sphi 0, %s115
      %s133 = sphi 0, %s133
      %s135 = sphi 0, %s133
      %s136 = sphi 0, %s135
      %s150 = sphi 0, %s136
      %s156 = sphi 0, %s158
      %s159 = sphi 0, %s156
      %s160 = sphi 0, %s159
      %s176 = sphi 0, %s160
    $region4: #{general_net_forward_clf.3} parent=1 // loop_header_branch
      %18 = sbr.rel (%p16) target = $region8
    $region5: #{general_net_forward_clf.3} parent=1 // loop_body
      %s20 = ssub.s32 %s15, 1
      %s21 = ssub.s32 %s15, 2
      %s22 = sadd.s32 %s15, 1
      %s23 = ssub.s32 %s15, %s22
      %p24 = scmp.eq.s32.totalorder %s23, 0
      %s26 = sadd.s32 %s25, 1
      %s27 = scalar_select %p24, %s25, %s26
      %p30 = pneg %p24
      %p31 = scmp.eq.s32.totalorder %s15, 1
      %p32 = por %p30, %p31
      %p33 = scmp.ne.s32.totalorder %s25, %s28
      %p34 = scmp.eq.s32.totalorder %s15, 0
      %p35 = por %p33, %p34
      %p36 = scmp.ne.s32.totalorder %s25, %s28
      %p37 = scmp.eq.s32.totalorder %s20, 1
      %p38 = por %p36, %p37
      %p39 = scmp.ne.s32.totalorder %s28, %s29
      %p40 = scmp.eq.s32.totalorder %s20, 0
      %p41 = por %p39, %p40
      %p42 = scmp.ne.s32.totalorder %s28, %s29
      %p43 = scmp.eq.s32.totalorder %s21, 1
      %p44 = por %p42, %p43
      %p46 = scmp.ne.s32.totalorder %s29, %s45
      %p47 = scmp.eq.s32.totalorder %s21, 0
      %p48 = por %p46, %p47
      %s50 = sadd.s32 %s49, 1
      %p53 = scmp.eq.s32.totalorder %s15, 1
      %p54 = scmp.ne.s32.totalorder %s49, %s51
      %p55 = scmp.eq.s32.totalorder %s15, 0
      %p56 = por %p54, %p55
      %p57 = scmp.ne.s32.totalorder %s49, %s51
      %p58 = scmp.eq.s32.totalorder %s20, 1
      %p59 = por %p57, %p58
      %p60 = scmp.ne.s32.totalorder %s51, %s52
      %p61 = scmp.eq.s32.totalorder %s20, 0
      %p62 = por %p60, %p61
      %p63 = scmp.ne.s32.totalorder %s51, %s52
      %p64 = scmp.eq.s32.totalorder %s21, 1
      %p65 = por %p63, %p64
      %p67 = scmp.ne.s32.totalorder %s52, %s66
      %p68 = scmp.eq.s32.totalorder %s21, 0
      %p69 = por %p67, %p68
      %s71 = sadd.s32 %s70, 1
      %p74 = scmp.eq.s32.totalorder %s15, 1
      %p75 = scmp.ne.s32.totalorder %s70, %s72
      %p76 = scmp.eq.s32.totalorder %s15, 0
      %p77 = por %p75, %p76
      %p78 = scmp.ne.s32.totalorder %s70, %s72
      %p79 = scmp.eq.s32.totalorder %s20, 1
      %p80 = por %p78, %p79
      %p81 = scmp.ne.s32.totalorder %s72, %s73
      %p82 = scmp.eq.s32.totalorder %s20, 0
      %p83 = por %p81, %p82
      %p84 = scmp.ne.s32.totalorder %s72, %s73
      %p85 = scmp.eq.s32.totalorder %s21, 1
      %p86 = por %p84, %p85
      %p88 = scmp.ne.s32.totalorder %s73, %s87
      %p89 = scmp.eq.s32.totalorder %s21, 0
      %p90 = por %p88, %p89
      %s92 = sadd.s32 %s91, 1
      %p95 = scmp.eq.s32.totalorder %s15, 1
      %p96 = scmp.ne.s32.totalorder %s91, %s93
      %p97 = scmp.eq.s32.totalorder %s15, 0
      %p98 = por %p96, %p97
      %p99 = scmp.ne.s32.totalorder %s91, %s93
      %p100 = scmp.eq.s32.totalorder %s20, 1
      %p101 = por %p99, %p100
      %p102 = scmp.ne.s32.totalorder %s93, %s94
      %p103 = scmp.eq.s32.totalorder %s20, 0
      %p104 = por %p102, %p103
      %p105 = scmp.ne.s32.totalorder %s93, %s94
      %p106 = scmp.eq.s32.totalorder %s21, 1
      %p107 = por %p105, %p106
      %p109 = scmp.ne.s32.totalorder %s94, %s108
      %p110 = scmp.eq.s32.totalorder %s21, 0
      %p111 = por %p109, %p110
      %s113 = sadd.s32 %s112, 1
      %p116 = scmp.eq.s32.totalorder %s15, 1
      %p117 = scmp.ne.s32.totalorder %s112, %s114
      %p118 = scmp.eq.s32.totalorder %s15, 0
      %p119 = por %p117, %p118
      %p120 = scmp.ne.s32.totalorder %s112, %s114
      %p121 = scmp.eq.s32.totalorder %s20, 1
      %p122 = por %p120, %p121
      %p123 = scmp.ne.s32.totalorder %s114, %s115
      %p124 = scmp.eq.s32.totalorder %s20, 0
      %p125 = por %p123, %p124
      %p126 = scmp.ne.s32.totalorder %s114, %s115
      %p127 = scmp.eq.s32.totalorder %s21, 1
      %p128 = por %p126, %p127
      %p130 = scmp.ne.s32.totalorder %s115, %s129
      %p131 = scmp.eq.s32.totalorder %s21, 0
      %p132 = por %p130, %p131
      %s134 = sadd.s32 %s133, 1
      %p137 = scmp.eq.s32.totalorder %s15, 1
      %p138 = scmp.ne.s32.totalorder %s133, %s135
      %p139 = scmp.eq.s32.totalorder %s15, 0
      %p140 = por %p138, %p139
      %p141 = scmp.ne.s32.totalorder %s133, %s135
      %p142 = scmp.eq.s32.totalorder %s20, 1
      %p143 = por %p141, %p142
      %p144 = scmp.ne.s32.totalorder %s135, %s136
      %p145 = scmp.eq.s32.totalorder %s20, 0
      %p146 = por %p144, %p145
      %p147 = scmp.ne.s32.totalorder %s135, %s136
      %p148 = scmp.eq.s32.totalorder %s21, 1
      %p149 = por %p147, %p148
      %p151 = scmp.ne.s32.totalorder %s136, %s150
      %p152 = scmp.eq.s32.totalorder %s21, 0
      %p153 = por %p151, %p152
      %s154 = ssub.s32 %s15, %s22
      %p155 = scmp.eq.s32.totalorder %s154, 0
      %s157 = sadd.s32 %s156, 1
      %s158 = scalar_select %p155, %s156, %s157
      %p161 = pneg %p155
      %p162 = scmp.eq.s32.totalorder %s15, 1
      %p163 = por %p161, %p162
      %p164 = scmp.ne.s32.totalorder %s156, %s159
      %p165 = scmp.eq.s32.totalorder %s15, 0
      %p166 = por %p164, %p165
      %p167 = scmp.ne.s32.totalorder %s156, %s159
      %p168 = scmp.eq.s32.totalorder %s20, 1
      %p169 = por %p167, %p168
      %p170 = scmp.ne.s32.totalorder %s159, %s160
      %p171 = scmp.eq.s32.totalorder %s20, 0
      %p172 = por %p170, %p171
      %p173 = scmp.ne.s32.totalorder %s159, %s160
      %p174 = scmp.eq.s32.totalorder %s21, 1
      %p175 = por %p173, %p174
      %p177 = scmp.ne.s32.totalorder %s160, %s176
      %p178 = scmp.eq.s32.totalorder %s21, 0
      %p179 = por %p177, %p178
      %p180 = scmp.le.s32.totalorder 1, %s15
      %p181 = scmp.lt.s32.totalorder %s15, 3
      %p182 = pnand %p180, %p181
      %p183 = pneg %p182
      // Predicated region
      $region9: #{general_net_forward_clf.3} parent=5 // pred_check
        _
      $region10: #{general_net_forward_clf.3} parent=5 // pred_check_branch
        %185 = sbr.rel (%p182) target = $region12
      $region11: #{general_net_forward_clf.3} parent=5 // pred_region
        %s186 = ssub.s32 %s15, 1
        // Predicated region
        $region13: #{general_net_forward_clf.3} parent=11 // pred_check
          %p187 = pneg %p62
        $region14: #{general_net_forward_clf.3} parent=11 // pred_check_branch
          %189 = sbr.rel (%p187) target = $region16
        $region15: #{general_net_forward_clf.3} parent=11 // pred_region
          _
        $region16: #{general_net_forward_clf.3} parent=11 // pred_fallthru
          _
        // Predicated region
        $region17: #{general_net_forward_clf.3} parent=11 // pred_check
          %p190 = pneg %p83
        $region18: #{general_net_forward_clf.3} parent=11 // pred_check_branch
          %192 = sbr.rel (%p190) target = $region20
        $region19: #{general_net_forward_clf.3} parent=11 // pred_region
          _
        $region20: #{general_net_forward_clf.3} parent=11 // pred_fallthru
          _
        // Predicated region
        $region21: #{general_net_forward_clf.3} parent=11 // pred_check
          %p193 = pneg %p104
        $region22: #{general_net_forward_clf.3} parent=11 // pred_check_branch
          %195 = sbr.rel (%p193) target = $region24
        $region23: #{general_net_forward_clf.3} parent=11 // pred_region
          _
        $region24: #{general_net_forward_clf.3} parent=11 // pred_fallthru
          _
        // Predicated region
        $region25: #{general_net_forward_clf.3} parent=11 // pred_check
          %p196 = pneg %p125
        $region26: #{general_net_forward_clf.3} parent=11 // pred_check_branch
          %198 = sbr.rel (%p196) target = $region28
        $region27: #{general_net_forward_clf.3} parent=11 // pred_region
          _
        $region28: #{general_net_forward_clf.3} parent=11 // pred_fallthru
          _
        // Predicated region
        $region29: #{general_net_forward_clf.3} parent=11 // pred_check
          %p199 = pneg %p146
        $region30: #{general_net_forward_clf.3} parent=11 // pred_check_branch
          %201 = sbr.rel (%p199) target = $region32
        $region31: #{general_net_forward_clf.3} parent=11 // pred_region
          _
        $region32: #{general_net_forward_clf.3} parent=11 // pred_fallthru
          _
      $region12: #{general_net_forward_clf.3} parent=5 // pred_fallthru
        _
      %p202 = scmp.lt.s32.totalorder %s15, 2
      // Predicated region
      $region33: #{general_net_forward_clf.3} parent=5 // pred_check
        %p203 = pneg %p202
      $region34: #{general_net_forward_clf.3} parent=5 // pred_check_branch
        %205 = sbr.rel (%p203) target = $region36
      $region35: #{general_net_forward_clf.3} parent=5 // pred_region
        // Predicated region
        $region37: #{general_net_forward_clf.3} parent=35 // pred_check
          %p206 = pneg %p35
        $region38: #{general_net_forward_clf.3} parent=35 // pred_check_branch
          %208 = sbr.rel (%p206) target = $region40
        $region39: #{general_net_forward_clf.3} parent=35 // pred_region
          %p209 = scmp.lt.s32.totalorder %s15, 1
          %s210 = scalar_select %p209, %s15, 1
          %s211 = smul.addr %s210, 11
          %s212 = smul.addr %s211, 4
          %s213 = scalar_lea.vmem %s0, %s212
        $region40: #{general_net_forward_clf.3} parent=35 // pred_fallthru
          _
      $region36: #{general_net_forward_clf.3} parent=5 // pred_fallthru
        _
      %p214 = scmp.le.s32.totalorder 1, %s15
      %p215 = scmp.lt.s32.totalorder %s15, 3
      %p216 = pnand %p214, %p215
      %p217 = pneg %p216
      // Predicated region
      $region41: #{general_net_forward_clf.3} parent=5 // pred_check
        _
      $region42: #{general_net_forward_clf.3} parent=5 // pred_check_branch
        %219 = sbr.rel (%p216) target = $region44
      $region43: #{general_net_forward_clf.3} parent=5 // pred_region
        %s220 = ssub.s32 %s15, 1
        %p221 = scmp.lt.s32.totalorder %s20, 1
        %s222 = scalar_select %p221, %s20, 1
        %s223 = smul.addr %s222, 11
        %s224 = smul.addr %s223, 4
        %s225 = scalar_lea.vmem %s0, %s224
        %p226 = pneg %p41
        %p227 = pneg %p38
        %p228 = pneg %p62
        %p229 = pneg %p59
        %p230 = pneg %p83
        %p231 = pneg %p80
        %p232 = pneg %p104
        %p233 = pneg %p101
        %p234 = pneg %p125
        %p235 = pneg %p122
        %p236 = pneg %p146
        %p237 = pneg %p143
        %p238 = pneg %p172
        %p239 = pneg %p169
        %s240 = sand.u32 %s159, 1
        %s241 = scalar_lea.sflag [#allocation3], %s240
        %s242 = sand.u32 %s159, 1
        %s243 = scalar_lea.vmem [#allocation2], %s242
        %p244 = scmp.lt.s32.totalorder %s20, 1
        %s245 = scalar_select %p244, %s20, 1
        %s246 = smul.addr %s245, 11
        %s247 = smul.addr %s246, 4
        %s248 = scalar_lea.vmem %s0, %s247
        %v250 = vld [vmem:[%s248] sm:$0xf]
        %v251 = vld [vmem:[%s248 + $0x4] sm:$0xf]
        %v252 = vld [vmem:[%s248 + $0x8] sm:$0xf]
        %v253 = vld [vmem:[%s248 + $0xc] sm:$0xf]
        %v254 = vld [vmem:[%s248 + $0x10] sm:$0xf]
        %v255 = vld [vmem:[%s248 + $0x14] sm:$0xf]
        %v256 = vld [vmem:[%s248 + $0x18] sm:$0xf]
        %v257 = vld [vmem:[%s248 + $0x1c] sm:$0xf]
        %v258 = vld [vmem:[%s248 + $0x20] sm:$0xf]
        %v259 = vld [vmem:[%s1] sm:$0xf]
        %v260 = vld [vmem:[%s1 + $0x4] sm:$0xf]
        %v261 = vld [vmem:[%s1 + $0x8] sm:$0xf]
        %v262 = vld [vmem:[%s1 + $0xc] sm:$0xf]
        %v263 = vld [vmem:[%s1 + $0x10] sm:$0xf]
        %v264 = vld [vmem:[%s1 + $0x14] sm:$0xf]
        %v265 = vld [vmem:[%s1 + $0x18] sm:$0xf]
        %v266 = vld [vmem:[%s1 + $0x1c] sm:$0xf]
        %v267 = vld [vmem:[%s248 + $0x24] sm:$0x1]
        %s268 = scalar_lea.vmem %s1, 32
        %v269 = vld [vmem:[%s268] sm:$0xf]
        %v270 = vld [vmem:[%s268 + $0x4] sm:$0xf]
        %v271 = vld [vmem:[%s268 + $0x8] sm:$0xf]
        %v272 = vld [vmem:[%s268 + $0xc] sm:$0xf]
        %v273 = vld [vmem:[%s268 + $0x10] sm:$0xf]
        %v274 = vld [vmem:[%s268 + $0x14] sm:$0xf]
        %v275 = vld [vmem:[%s268 + $0x18] sm:$0xf]
        %v276 = vld [vmem:[%s268 + $0x1c] sm:$0xf]
        %v287 = vunpack.c.l.b16 %v250
        %v288 = vunpack.c.l.b16 %v251
        %v289 = vunpack.c.l.b16 %v252
        %v290 = vunpack.c.l.b16 %v253
        %v291 = vunpack.c.l.b16 %v254
        %v292 = vunpack.c.l.b16 %v255
        %v293 = vunpack.c.l.b16 %v256
        %v294 = vunpack.c.l.b16 %v257
        %v295 = vunpack.c.l.b16 %v258
        %v296 = vunpack.c.l.b16 %v267
        %v297 = vpack.c.b16 %v288, %v287
        %v298 = vpack.c.b16 %v290, %v289
        %v299 = vpack.c.b16 %v292, %v291
        %v300 = vpack.c.b16 %v294, %v293
        %v301 = vpack.c.b16 %v296, %v295
        %vm302 = vsmask.f32 7424
        %v304 = vshrl.u32 %v297, 16
        %v306 = vshll.u32 %v297, 16
        %v308 = vrot.slane %v306, 1
        %v309 = vor.u32 %v304, %v308
        %v311 = vshll.u32 %v298, 16
        %v313 = vrot.slane %v311, 1
        %v314 = vsel %vm302, %v309, %v313
        %v315 = vshrl.u32 %v298, 16
        %v317 = vor.u32 %v315, %v313
        %v319 = vshll.u32 %v299, 16
        %v321 = vrot.slane %v319, 1
        %v322 = vsel %vm302, %v317, %v321
        %v323 = vshrl.u32 %v299, 16
        %v325 = vor.u32 %v323, %v321
        %v327 = vshll.u32 %v300, 16
        %v329 = vrot.slane %v327, 1
        %v330 = vsel %vm302, %v325, %v329
        %v331 = vshrl.u32 %v300, 16
        %v333 = vor.u32 %v331, %v329
        %v335 = vshll.u32 %v301, 16
        %v337 = vrot.slane %v335, 1
        %v338 = vsel %vm302, %v333, %v337
        %v339 = vshrl.u32 %v301, 16
        %v341 = vor.u32 %v339, %v337
        %v350 = vunpack.c.l.b16 %v269
        %v351 = vunpack.c.l.b16 %v270
        %v352 = vunpack.c.l.b16 %v271
        %v353 = vunpack.c.l.b16 %v272
        %v354 = vunpack.c.l.b16 %v273
        %v355 = vunpack.c.l.b16 %v274
        %v356 = vunpack.c.l.b16 %v275
        %v357 = vunpack.c.l.b16 %v276
        %v358 = vpack.c.b16 %v351, %v350
        %v359 = vpack.c.b16 %v353, %v352
        %v360 = vpack.c.b16 %v355, %v354
        %v361 = vpack.c.b16 %v357, %v356
        %vm366 = vcmask 523264
        %v368 = vsel %vm366, %v314, 0
        %v371 = vsel %vm366, %v322, 0
        %v374 = vsel %vm366, %v330, 0
        %v377 = vsel %vm366, %v338, 0
        %v380 = vsel %vm366, %v341, 0
        %382 = vmatpush.bf16.msra.mxu0 0
        %383 = vmatpush.bf16.msra.mxu0 0
        %384 = vmatpush.bf16.msra.mxu0 0
        %385 = vmatpush.bf16.msra.mxu0 0
        %386 = vmatpush.bf16.msra.mxu0 %v361
        %387 = vmatpush.bf16.msra.mxu0 %v360
        %388 = vmatpush.bf16.msra.mxu0 %v359
        %389 = vmatpush.bf16.msra.mxu0 %v358
        %390 = vmatmul.bf16.gmra.mxu0 %v368
        %v391 = vpop.f32.mrf.mxu0
        %v392 = vadd.f32 0.0, %v391
        %v393 = vpop.f32.mrf.mxu0
        %v394 = vadd.f32 0.0, %v393
        %395 = vmatmul.bf16.gmra.mxu0 %v371
        %v396 = vpop.f32.mrf.mxu0
        %v397 = vadd.f32 0.0, %v396
        %v398 = vpop.f32.mrf.mxu0
        %v399 = vadd.f32 0.0, %v398
        %400 = vmatmul.bf16.gmra.mxu0 %v374
        %v401 = vpop.f32.mrf.mxu0
        %v402 = vadd.f32 0.0, %v401
        %v403 = vpop.f32.mrf.mxu0
        %v404 = vadd.f32 0.0, %v403
        %405 = vmatmul.bf16.gmra.mxu0 %v377
        %v406 = vpop.f32.mrf.mxu0
        %v407 = vadd.f32 0.0, %v406
        %v408 = vpop.f32.mrf.mxu0
        %v409 = vadd.f32 0.0, %v408
        %410 = vmatmul.bf16.gmra.mxu0 %v380
        %v411 = vpop.f32.mrf.mxu0
        %v412 = vadd.f32 0.0, %v411
        %v413 = vpop.f32.mrf.mxu0
        %414 = vdwg.mxu0
        %v415 = vpack.c.b16 %v295, %v295
        %v424 = vunpack.c.l.b16 %v259
        %v425 = vunpack.c.l.b16 %v260
        %v426 = vunpack.c.l.b16 %v261
        %v427 = vunpack.c.l.b16 %v262
        %v428 = vunpack.c.l.b16 %v263
        %v429 = vunpack.c.l.b16 %v264
        %v430 = vunpack.c.l.b16 %v265
        %v431 = vunpack.c.l.b16 %v266
        %v432 = vpack.c.b16 %v425, %v424
        %v433 = vpack.c.b16 %v427, %v426
        %v434 = vpack.c.b16 %v429, %v428
        %v435 = vpack.c.b16 %v431, %v430
        %v440 = vsel %vm366, %v297, 0
        %v442 = vsel %vm366, %v298, 0
        %v444 = vsel %vm366, %v299, 0
        %v446 = vsel %vm366, %v300, 0
        %v449 = vsel %vm366, %v415, 0
        %451 = vmatpush.bf16.msra.mxu0 0
        %452 = vmatpush.bf16.msra.mxu0 0
        %453 = vmatpush.bf16.msra.mxu0 0
        %454 = vmatpush.bf16.msra.mxu0 0
        %455 = vmatpush.bf16.msra.mxu0 %v435
        %456 = vmatpush.bf16.msra.mxu0 %v434
        %457 = vmatpush.bf16.msra.mxu0 %v433
        %458 = vmatpush.bf16.msra.mxu0 %v432
        %459 = vmatmul.bf16.gmra.mxu0 %v440
        %v460 = vpop.f32.mrf.mxu0
        %v461 = vadd.f32 %v392, %v460
        %v462 = vpop.f32.mrf.mxu0
        %v463 = vadd.f32 %v394, %v462
        %464 = vmatmul.bf16.gmra.mxu0 %v442
        %v465 = vpop.f32.mrf.mxu0
        %v466 = vadd.f32 %v397, %v465
        %v467 = vpop.f32.mrf.mxu0
        %v468 = vadd.f32 %v399, %v467
        %469 = vmatmul.bf16.gmra.mxu0 %v444
        %v470 = vpop.f32.mrf.mxu0
        %v471 = vadd.f32 %v402, %v470
        %v472 = vpop.f32.mrf.mxu0
        %v473 = vadd.f32 %v404, %v472
        %474 = vmatmul.bf16.gmra.mxu0 %v446
        %v475 = vpop.f32.mrf.mxu0
        %v476 = vadd.f32 %v407, %v475
        %v477 = vpop.f32.mrf.mxu0
        %v478 = vadd.f32 %v409, %v477
        %479 = vmatmul.bf16.gmra.mxu0 %v449
        %v480 = vpop.f32.mrf.mxu0
        %v481 = vadd.f32 %v412, %v480
        %v482 = vpop.f32.mrf.mxu0
        %483 = vdwg.mxu0
        %v484 = vld [vmem:[%s248 + $0x4] sm:$0xf]
        %v485 = vld [vmem:[%s248 + $0x8] sm:$0xf]
        %v486 = vld [vmem:[%s248 + $0xc] sm:$0xf]
        %v487 = vld [vmem:[%s248 + $0x10] sm:$0xf]
        %v488 = vld [vmem:[%s248 + $0x14] sm:$0xf]
        %v489 = vld [vmem:[%s248 + $0x18] sm:$0xf]
        %v490 = vld [vmem:[%s248 + $0x1c] sm:$0xf]
        %v491 = vld [vmem:[%s248 + $0x20] sm:$0xf]
        %v492 = vld [vmem:[%s248 + $0x24] sm:$0xf]
        %v493 = vld [vmem:[%s248 + $0x28] sm:$0x1]
        %s494 = scalar_lea.vmem %s1, 64
        %v495 = vld [vmem:[%s494] sm:$0xf]
        %v496 = vld [vmem:[%s494 + $0x4] sm:$0xf]
        %v497 = vld [vmem:[%s494 + $0x8] sm:$0xf]
        %v498 = vld [vmem:[%s494 + $0xc] sm:$0xf]
        %v499 = vld [vmem:[%s494 + $0x10] sm:$0xf]
        %v500 = vld [vmem:[%s494 + $0x14] sm:$0xf]
        %v501 = vld [vmem:[%s494 + $0x18] sm:$0xf]
        %v502 = vld [vmem:[%s494 + $0x1c] sm:$0xf]
        %v513 = vunpack.c.l.b16 %v484
        %v514 = vunpack.c.l.b16 %v485
        %v515 = vunpack.c.l.b16 %v486
        %v516 = vunpack.c.l.b16 %v487
        %v517 = vunpack.c.l.b16 %v488
        %v518 = vunpack.c.l.b16 %v489
        %v519 = vunpack.c.l.b16 %v490
        %v520 = vunpack.c.l.b16 %v491
        %v521 = vunpack.c.l.b16 %v492
        %v522 = vunpack.c.l.b16 %v493
        %v523 = vpack.c.b16 %v514, %v513
        %v524 = vpack.c.b16 %v516, %v515
        %v525 = vpack.c.b16 %v518, %v517
        %v526 = vpack.c.b16 %v520, %v519
        %v527 = vpack.c.b16 %v522, %v521
        %v529 = vshrl.u32 %v523, 16
        %v531 = vshll.u32 %v523, 16
        %v533 = vrot.slane %v531, 1
        %v534 = vor.u32 %v529, %v533
        %v536 = vshll.u32 %v524, 16
        %v538 = vrot.slane %v536, 1
        %v539 = vsel %vm302, %v534, %v538
        %v540 = vshrl.u32 %v524, 16
        %v542 = vor.u32 %v540, %v538
        %v544 = vshll.u32 %v525, 16
        %v546 = vrot.slane %v544, 1
        %v547 = vsel %vm302, %v542, %v546
        %v548 = vshrl.u32 %v525, 16
        %v550 = vor.u32 %v548, %v546
        %v552 = vshll.u32 %v526, 16
        %v554 = vrot.slane %v552, 1
        %v555 = vsel %vm302, %v550, %v554
        %v556 = vshrl.u32 %v526, 16
        %v558 = vor.u32 %v556, %v554
        %v560 = vshll.u32 %v527, 16
        %v562 = vrot.slane %v560, 1
        %v563 = vsel %vm302, %v558, %v562
        %v564 = vshrl.u32 %v527, 16
        %v566 = vor.u32 %v564, %v562
        %v575 = vunpack.c.l.b16 %v495
        %v576 = vunpack.c.l.b16 %v496
        %v577 = vunpack.c.l.b16 %v497
        %v578 = vunpack.c.l.b16 %v498
        %v579 = vunpack.c.l.b16 %v499
        %v580 = vunpack.c.l.b16 %v500
        %v581 = vunpack.c.l.b16 %v501
        %v582 = vunpack.c.l.b16 %v502
        %v583 = vpack.c.b16 %v576, %v575
        %v584 = vpack.c.b16 %v578, %v577
        %v585 = vpack.c.b16 %v580, %v579
        %v586 = vpack.c.b16 %v582, %v581
        %v592 = vsel %vm366, %v539, 0
        %v595 = vsel %vm366, %v547, 0
        %v598 = vsel %vm366, %v555, 0
        %v601 = vsel %vm366, %v563, 0
        %v604 = vsel %vm366, %v566, 0
        %606 = vmatpush.bf16.msra.mxu0 0
        %607 = vmatpush.bf16.msra.mxu0 0
        %608 = vmatpush.bf16.msra.mxu0 0
        %609 = vmatpush.bf16.msra.mxu0 0
        %610 = vmatpush.bf16.msra.mxu0 %v586
        %611 = vmatpush.bf16.msra.mxu0 %v585
        %612 = vmatpush.bf16.msra.mxu0 %v584
        %613 = vmatpush.bf16.msra.mxu0 %v583
        %614 = vmatmul.bf16.gmra.mxu0 %v592
        %v615 = vpop.f32.mrf.mxu0
        %v616 = vadd.f32 0.0, %v615
        %v617 = vpop.f32.mrf.mxu0
        %v618 = vadd.f32 0.0, %v617
        %619 = vmatmul.bf16.gmra.mxu0 %v595
        %v620 = vpop.f32.mrf.mxu0
        %v621 = vadd.f32 0.0, %v620
        %v622 = vpop.f32.mrf.mxu0
        %v623 = vadd.f32 0.0, %v622
        %624 = vmatmul.bf16.gmra.mxu0 %v598
        %v625 = vpop.f32.mrf.mxu0
        %v626 = vadd.f32 0.0, %v625
        %v627 = vpop.f32.mrf.mxu0
        %v628 = vadd.f32 0.0, %v627
        %629 = vmatmul.bf16.gmra.mxu0 %v601
        %v630 = vpop.f32.mrf.mxu0
        %v631 = vadd.f32 0.0, %v630
        %v632 = vpop.f32.mrf.mxu0
        %v633 = vadd.f32 0.0, %v632
        %634 = vmatmul.bf16.gmra.mxu0 %v604
        %v635 = vpop.f32.mrf.mxu0
        %v636 = vadd.f32 0.0, %v635
        %v637 = vpop.f32.mrf.mxu0
        %638 = vdwg.mxu0
        %v639 = vadd.f32 %v461, %v616
        %v640 = vadd.f32 %v463, %v618
        %v641 = vadd.f32 %v466, %v621
        %v642 = vadd.f32 %v468, %v623
        %v643 = vadd.f32 %v471, %v626
        %v644 = vadd.f32 %v473, %v628
        %v645 = vadd.f32 %v476, %v631
        %v646 = vadd.f32 %v478, %v633
        %v647 = vadd.f32 %v481, %v636
        %v648 = vld [vmem:[%s248 + $0x4] sm:$0xe]
        %s649 = scalar_lea.vmem %s1, 96
        %v650 = vld [vmem:[%s649] sm:$0xf]
        %v651 = vld [vmem:[%s649 + $0x4] sm:$0xf]
        %v652 = vld [vmem:[%s649 + $0x8] sm:$0xf]
        %v653 = vld [vmem:[%s649 + $0xc] sm:$0xf]
        %v654 = vld [vmem:[%s649 + $0x10] sm:$0xf]
        %v655 = vld [vmem:[%s649 + $0x14] sm:$0xf]
        %v656 = vld [vmem:[%s649 + $0x18] sm:$0xf]
        %v657 = vld [vmem:[%s649 + $0x1c] sm:$0xf]
        %v659 = vunpack.c.l.b16 %v648
        %v660 = vpack.c.b16 %v514, %v659
        %vm661 = vcmask 1046528
        %v662 = vrot.slane %v660, 1
        %v663 = vrot.slane %v524, 1
        %v664 = vsel %vm661, %v662, %v663
        %v665 = vrot.slane %v525, 1
        %v666 = vsel %vm661, %v663, %v665
        %v667 = vrot.slane %v526, 1
        %v668 = vsel %vm661, %v665, %v667
        %v669 = vrot.slane %v527, 1
        %v670 = vsel %vm661, %v667, %v669
        %v679 = vunpack.c.l.b16 %v650
        %v680 = vunpack.c.l.b16 %v651
        %v681 = vunpack.c.l.b16 %v652
        %v682 = vunpack.c.l.b16 %v653
        %v683 = vunpack.c.l.b16 %v654
        %v684 = vunpack.c.l.b16 %v655
        %v685 = vunpack.c.l.b16 %v656
        %v686 = vunpack.c.l.b16 %v657
        %v687 = vpack.c.b16 %v680, %v679
        %v688 = vpack.c.b16 %v682, %v681
        %v689 = vpack.c.b16 %v684, %v683
        %v690 = vpack.c.b16 %v686, %v685
        %v696 = vsel %vm366, %v664, 0
        %v699 = vsel %vm366, %v666, 0
        %v702 = vsel %vm366, %v668, 0
        %v705 = vsel %vm366, %v670, 0
        %v708 = vsel %vm366, %v669, 0
        %710 = vmatpush.bf16.msra.mxu0 0
        %711 = vmatpush.bf16.msra.mxu0 0
        %712 = vmatpush.bf16.msra.mxu0 0
        %713 = vmatpush.bf16.msra.mxu0 0
        %714 = vmatpush.bf16.msra.mxu0 %v690
        %715 = vmatpush.bf16.msra.mxu0 %v689
        %716 = vmatpush.bf16.msra.mxu0 %v688
        %717 = vmatpush.bf16.msra.mxu0 %v687
        %718 = vmatmul.bf16.gmra.mxu0 %v696
        %v719 = vpop.f32.mrf.mxu0
        %v720 = vadd.f32 0.0, %v719
        %v721 = vpop.f32.mrf.mxu0
        %v722 = vadd.f32 0.0, %v721
        %723 = vmatmul.bf16.gmra.mxu0 %v699
        %v724 = vpop.f32.mrf.mxu0
        %v725 = vadd.f32 0.0, %v724
        %v726 = vpop.f32.mrf.mxu0
        %v727 = vadd.f32 0.0, %v726
        %728 = vmatmul.bf16.gmra.mxu0 %v702
        %v729 = vpop.f32.mrf.mxu0
        %v730 = vadd.f32 0.0, %v729
        %v731 = vpop.f32.mrf.mxu0
        %v732 = vadd.f32 0.0, %v731
        %733 = vmatmul.bf16.gmra.mxu0 %v705
        %v734 = vpop.f32.mrf.mxu0
        %v735 = vadd.f32 0.0, %v734
        %v736 = vpop.f32.mrf.mxu0
        %v737 = vadd.f32 0.0, %v736
        %738 = vmatmul.bf16.gmra.mxu0 %v708
        %v739 = vpop.f32.mrf.mxu0
        %v740 = vadd.f32 0.0, %v739
        %v741 = vpop.f32.mrf.mxu0
        %742 = vdwg.mxu0
        %v743 = vadd.f32 %v639, %v720
        %v744 = vadd.f32 %v640, %v722
        %v745 = vadd.f32 %v641, %v725
        %v746 = vadd.f32 %v642, %v727
        %v747 = vadd.f32 %v643, %v730
        %v748 = vadd.f32 %v644, %v732
        %v749 = vadd.f32 %v645, %v735
        %v750 = vadd.f32 %v646, %v737
        %v751 = vadd.f32 %v647, %v740
        %v752 = vld [vmem:[%s2] sm:$0x1]
        %v754 = vperm.slane %v752, 0
        %v756 = vadd.f32 %v743, %v754
        %v757 = vadd.f32 %v744, %v754
        %v758 = vadd.f32 %v745, %v754
        %v759 = vadd.f32 %v746, %v754
        %v760 = vadd.f32 %v747, %v754
        %v761 = vadd.f32 %v748, %v754
        %v762 = vadd.f32 %v749, %v754
        %v763 = vadd.f32 %v750, %v754
        %v764 = vadd.f32 %v751, %v754
        %v765 = vmax.f32 %v756, 0.0
        %v766 = vmax.f32 %v757, 0.0
        %v767 = vmax.f32 %v758, 0.0
        %v768 = vmax.f32 %v759, 0.0
        %v769 = vmax.f32 %v760, 0.0
        %v770 = vmax.f32 %v761, 0.0
        %v771 = vmax.f32 %v762, 0.0
        %v772 = vmax.f32 %v763, 0.0
        %v773 = vmax.f32 %v764, 0.0
        %v774 = vld [vmem:[%s3] sm:$0xff]
        %v775 = vld [vmem:[%s3 + $0x8] sm:$0xff]
        %v776 = vld [vmem:[%s3 + $0x10] sm:$0xff]
        %v777 = vld [vmem:[%s3 + $0x18] sm:$0xff]
        %v778 = vld [vmem:[%s3 + $0x20] sm:$0xff]
        %v779 = vld [vmem:[%s3 + $0x28] sm:$0xff]
        %v780 = vld [vmem:[%s3 + $0x30] sm:$0xff]
        %v781 = vld [vmem:[%s3 + $0x38] sm:$0xff]
        %v782 = vld [vmem:[%s3 + $0x40] sm:$0xff]
        %784 = vset.pattern.permute.xlu0 0
        %785 = vperm.xlu0 %784, %v774
        %v786 = vpop.permute.xlu0 %785
        %789 = vset.pattern.permute.xlu0 0
        %790 = vperm.xlu0 %789, %v775
        %v791 = vpop.permute.xlu0 %790
        %794 = vset.pattern.permute.xlu0 0
        %795 = vperm.xlu0 %794, %v776
        %v796 = vpop.permute.xlu0 %795
        %799 = vset.pattern.permute.xlu0 0
        %800 = vperm.xlu0 %799, %v777
        %v801 = vpop.permute.xlu0 %800
        %804 = vset.pattern.permute.xlu0 0
        %805 = vperm.xlu0 %804, %v778
        %v806 = vpop.permute.xlu0 %805
        %809 = vset.pattern.permute.xlu0 0
        %810 = vperm.xlu0 %809, %v779
        %v811 = vpop.permute.xlu0 %810
        %814 = vset.pattern.permute.xlu0 0
        %815 = vperm.xlu0 %814, %v780
        %v816 = vpop.permute.xlu0 %815
        %819 = vset.pattern.permute.xlu0 0
        %820 = vperm.xlu0 %819, %v781
        %v821 = vpop.permute.xlu0 %820
        %824 = vset.pattern.permute.xlu0 0
        %825 = vperm.xlu0 %824, %v782
        %v826 = vpop.permute.xlu0 %825
        %v828 = vmul.f32 %v765, %v786
        %v829 = vmul.f32 %v766, %v791
        %v830 = vmul.f32 %v767, %v796
        %v831 = vmul.f32 %v768, %v801
        %v832 = vmul.f32 %v769, %v806
        %v833 = vmul.f32 %v770, %v811
        %v834 = vmul.f32 %v771, %v816
        %v835 = vmul.f32 %v772, %v821
        %v836 = vmul.f32 %v773, %v826
        %v837 = vadd.f32 %v828, %v829
        %v838 = vadd.f32 %v837, %v830
        %v839 = vadd.f32 %v838, %v831
        %v840 = vadd.f32 %v839, %v832
        %v841 = vadd.f32 %v840, %v833
        %v842 = vadd.f32 %v841, %v834
        %v843 = vadd.f32 %v842, %v835
        %v844 = vadd.f32 %v843, %v836
        %v845 = vrot.slane %v844, 4
        %v846 = vadd.f32 %v844, %v845
        %v847 = vrot.slane %v846, 2
        %v848 = vadd.f32 %v846, %v847
        %v849 = vrot.slane %v848, 1
        %v850 = vadd.f32 %v848, %v849
        %v851 = vld [vmem:[%s4] sm:$0xff]
        %v852 = vld [vmem:[%s4 + $0x8] sm:$0xff]
        %v853 = vld [vmem:[%s4 + $0x10] sm:$0xff]
        %v854 = vld [vmem:[%s4 + $0x18] sm:$0xff]
        %v855 = vld [vmem:[%s4 + $0x20] sm:$0xff]
        %v856 = vld [vmem:[%s4 + $0x28] sm:$0xff]
        %v857 = vld [vmem:[%s4 + $0x30] sm:$0xff]
        %v858 = vld [vmem:[%s4 + $0x38] sm:$0xff]
        %v859 = vld [vmem:[%s4 + $0x40] sm:$0xff]
        %v860 = vld [vmem:[%s4 + $0x48] sm:$0xff]
        %v861 = vld [vmem:[%s4 + $0x50] sm:$0xff]
        %v862 = vld [vmem:[%s4 + $0x58] sm:$0xff]
        %v863 = vld [vmem:[%s4 + $0x60] sm:$0xff]
        %v864 = vld [vmem:[%s4 + $0x68] sm:$0xff]
        %v865 = vld [vmem:[%s4 + $0x70] sm:$0xff]
        %v866 = vld [vmem:[%s4 + $0x78] sm:$0xff]
        %v867 = vld [vmem:[%s5] sm:$0x1]
        %868 = vmatpush.msra.mxu0 %v866
        %869 = vmatpush.msra.mxu0 %v865
        %870 = vmatpush.msra.mxu0 %v864
        %871 = vmatpush.msra.mxu0 %v863
        %872 = vmatpush.msra.mxu0 %v862
        %873 = vmatpush.msra.mxu0 %v861
        %874 = vmatpush.msra.mxu0 %v860
        %875 = vmatpush.msra.mxu0 %v859
        %876 = vmatpush.msra.mxu0 %v858
        %877 = vmatpush.msra.mxu0 %v857
        %878 = vmatpush.msra.mxu0 %v856
        %879 = vmatpush.msra.mxu0 %v855
        %880 = vmatpush.msra.mxu0 %v854
        %881 = vmatpush.msra.mxu0 %v853
        %882 = vmatpush.msra.mxu0 %v852
        %883 = vmatpush.msra.mxu0 %v851
        %884 = vmatmul.f32.gmra.mxu0 %v850
        %v885 = vpop.f32.mrf.mxu0
        %v886 = vadd.f32 %v867, %v885
        %887 = vdwg.mxu0
        %888 = vst [vmem:[%s243] sm:$0x1] %v886
        %s889 = sand.u32 %s159, 1
        %s890 = scalar_lea.sflag [#allocation3], %s889
        %s891 = sand.u32 %s159, 1
        %s892 = scalar_lea.vmem [#allocation2], %s891
        // Predicated region
        $region45: #{general_net_forward_clf.3} parent=43 // pred_check
          %p893 = pneg %p169
        $region46: #{general_net_forward_clf.3} parent=43 // pred_check_branch
          %895 = sbr.rel (%p893) target = $region48
        $region47: #{general_net_forward_clf.3} parent=43 // pred_region
          %897 = vsyncadd %s890, 0
          %s898 = scalar_lea.hbm %s6, %s20
          %s900 = sshll.u32 %s892, 4
          %s901 = int_to_ptr.vmem [resolvable:$true] %s900
          %s902 = sshll.u32 %s898, 4
          %s903 = int_to_ptr.hbm [resolvable:$true] %s902
          %905 = dma.vmem_to_hbm [thread:$0]  %s901, 16, %s903, %s890
        $region48: #{general_net_forward_clf.3} parent=43 // pred_fallthru
          _
      $region44: #{general_net_forward_clf.3} parent=5 // pred_fallthru
        _
      %p906 = scmp.le.s32.totalorder 2, %s15
      // Predicated region
      $region49: #{general_net_forward_clf.3} parent=5 // pred_check
        %p907 = pneg %p906
      $region50: #{general_net_forward_clf.3} parent=5 // pred_check_branch
        %909 = sbr.rel (%p907) target = $region52
      $region51: #{general_net_forward_clf.3} parent=5 // pred_region
        %s910 = ssub.s32 %s15, 2
        // Predicated region
        $region53: #{general_net_forward_clf.3} parent=51 // pred_check
          %p911 = pneg %p175
        $region54: #{general_net_forward_clf.3} parent=51 // pred_check_branch
          %913 = sbr.rel (%p911) target = $region56
        $region55: #{general_net_forward_clf.3} parent=51 // pred_region
          %s914 = sand.u32 %s160, 1
          %s915 = scalar_lea.sflag [#allocation3], %s914
          %s916 = sand.u32 %s160, 1
          %s917 = scalar_lea.vmem [#allocation2], %s916
          %919 = dma.done %s915, 16
        $region56: #{general_net_forward_clf.3} parent=51 // pred_fallthru
          _
      $region52: #{general_net_forward_clf.3} parent=5 // pred_fallthru
        _
    $region6: #{general_net_forward_clf.3} parent=1 // loop_footer
      %s19 = sadd.s32 1, %s15
    $region7: #{general_net_forward_clf.3} parent=1 // loop_footer_branch
      %14 = sbr.rel target = $region3
    $region8: #{general_net_forward_clf.3} parent=1 // loop_exit
      _
    %920 = vsyncpa [#allocation3], 1
    %s921 = scalar_lea.sflag [#allocation3], 1
    %922 = vsyncpa %s921, 1

</llo_original>
